<compile_context>
chip_gen: v5e
topology: v5e:2x2
jax: 0.10.0
libtpu: 0.0.40
codegen_flags: <defaults>
</compile_context>

<pallas_src>
import math

import jax
import jax.numpy as jnp
from jax import lax
from jax.experimental import pallas as pl
from jax.experimental.pallas import tpu as pltpu

# ----------------------------- config ("cfg") --------------------------------
MODULES = {"mod_a": {"hidden_size": 32}, "mod_b": {"hidden_size": 32}}
DYNAMIC_INPUTS = 3
STATIC_INPUTS = 2
N_TARGETS = 2

INPUT_SIZE = DYNAMIC_INPUTS + STATIC_INPUTS            # fc0 input per module
TOTAL_HIDDEN = sum(v["hidden_size"] for v in MODULES.values())
LEN_MOD = len(MODULES)
MLP_HIDDEN = TOTAL_HIDDEN // LEN_MOD                   # make_mlp hidden dim
MLP_OUT = TOTAL_HIDDEN // 3                            # make_mlp output dim

BATCH_TILE = 8                                         # batch rows per grid step


# ------------------------------ Pallas kernel ---------------------------------
def _modular_lstm_fused_kernel(x_ref, w_in_ref, b_in_ref, whh_ref,
                               w_out_ref, b_out_ref, out_ref, hseq_scr):
    """Fused (all modules) fc0+LSTM recurrence + folded MLP/head, one batch tile.

    x_ref:     (TB, T, F)  f32 input tile, batch-first
    w_in_ref:  (4, F, Ht)  bf16 folded input weights (W0@Wih), gate order i,f,g,o
    b_in_ref:  (4, 1, Ht)  f32  folded biases (b0@Wih + b_ih + b_hh)
    whh_ref:   (4, Ht, Ht) bf16 per-gate block-diagonal recurrent weights
    w_out_ref: (Ht, n_out) bf16 folded interaction-MLP + head weight
    b_out_ref: (1, n_out)  f32  folded interaction-MLP + head bias
    out_ref:   (TB, T, n_out) f32 output tile
    hseq_scr:  (TB, T, Ht) f32 VMEM scratch holding the hidden sequence
    """
    TB, T, F = x_ref.shape
    Ht = whh_ref.shape[-1]

    # ---- hoisted input projection: one (TB*T, F) matmul per gate, done once ----
    # (reshapes below only merge/split leading dims; minor dim is unchanged)
    x2 = x_ref[...].reshape(TB * T, F).astype(jnp.bfloat16)
    pre = []
    for g in range(4):
        pg = jnp.dot(x2, w_in_ref[g],
                     preferred_element_type=jnp.float32) + b_in_ref[g]
        pre.append(pg.reshape(TB, T, Ht))                     # f32 (TB, T, Ht)

    # Hoist the recurrent-weight loads out of the time loop.
    whh = [whh_ref[g] for g in range(4)]                      # bf16 (Ht, Ht)

    h = jnp.zeros((TB, Ht), jnp.float32)
    c = jnp.zeros((TB, Ht), jnp.float32)

    # ---- recurrence: fully unrolled static T loop; only h @ Whh per gate ----
    for t in range(T):
        hb = h.astype(jnp.bfloat16)
        zi = pre[0][:, t, :] + jnp.dot(hb, whh[0], preferred_element_type=jnp.float32)
        zf = pre[1][:, t, :] + jnp.dot(hb, whh[1], preferred_element_type=jnp.float32)
        zg = pre[2][:, t, :] + jnp.dot(hb, whh[2], preferred_element_type=jnp.float32)
        zo = pre[3][:, t, :] + jnp.dot(hb, whh[3], preferred_element_type=jnp.float32)
        i_g = jax.nn.sigmoid(zi)
        f_g = jax.nn.sigmoid(zf)
        g_g = jnp.tanh(zg)
        o_g = jax.nn.sigmoid(zo)
        c = f_g * c + i_g * g_g
        h = o_g * jnp.tanh(c)
        hseq_scr[:, t, :] = h                                 # static t store

    # ---- single folded (interaction MLP + head) matmul straight from VMEM ----
    hs = hseq_scr[...].reshape(TB * T, Ht).astype(jnp.bfloat16)
    y = jnp.dot(hs, w_out_ref[...],
                preferred_element_type=jnp.float32) + b_out_ref[...]
    out_ref[...] = y.reshape(TB, T, -1)


# --------------------------------- wrapper ------------------------------------
@jax.jit
def modular_lstm_forward(x, fused):
    """x: (B, T, F) f32 batch-first -> (B, T, n_targets) f32."""
    B, T, F = x.shape
    Ht = fused["whh"].shape[-1]
    n_out = fused["b_out"].shape[-1]
    TB = min(B, BATCH_TILE)                          # batch tile per grid step
    grid = (pl.cdiv(B, TB),)

    return pl.pallas_call(
        _modular_lstm_fused_kernel,
        out_shape=jax.ShapeDtypeStruct((B, T, n_out), jnp.float32),
        grid_spec=pltpu.PrefetchScalarGridSpec(
            num_scalar_prefetch=0,
            grid=grid,
            in_specs=[
                pl.BlockSpec((TB, T, F), lambda b: (b, 0, 0)),       # x tile
                pl.BlockSpec((4, F, Ht), lambda b: (0, 0, 0)),       # w_in (resident)
                pl.BlockSpec((4, 1, Ht), lambda b: (0, 0, 0)),       # b_in
                pl.BlockSpec((4, Ht, Ht), lambda b: (0, 0, 0)),      # whh
                pl.BlockSpec((Ht, n_out), lambda b: (0, 0)),         # w_out
                pl.BlockSpec((1, n_out), lambda b: (0, 0)),          # b_out
            ],
            out_specs=pl.BlockSpec((TB, T, n_out), lambda b: (b, 0, 0)),
            scratch_shapes=[pltpu.VMEM((TB, T, Ht), jnp.float32)],
        ),
        compiler_params=pltpu.CompilerParams(
            dimension_semantics=("parallel",)),
    )(x, fused["w_in"], fused["b_in"], fused["whh"],
      fused["w_out"], fused["b_out"])


# --------------------------- param fusion / folding ----------------------------
def _block_diag(blocks):
    n = sum(b.shape[0] for b in blocks)
    m = sum(b.shape[1] for b in blocks)
    out = jnp.zeros((n, m), blocks[0].dtype)
    r = c = 0
    for b in blocks:
        out = out.at[r:r + b.shape[0], c:c + b.shape[1]].set(b)
        r += b.shape[0]
        c += b.shape[1]
    return out


def fuse_params(params):
    """Fold fc0 into the LSTM input weights, fuse all modules per gate, and
    collapse the identity-activation interaction MLP + head into one Linear."""
    w_in_g, b_in_g, whh_g = [], [], []
    for g in range(4):                                    # PyTorch gate order i,f,g,o
        w_cols, b_cols, blocks = [], [], []
        for k in MODULES:
            p = params["modules"][k]
            H = p["w0"].shape[1]
            wih_gm = p["wih"][:, g * H:(g + 1) * H]       # (H, H)
            whh_gm = p["whh"][:, g * H:(g + 1) * H]       # (H, H)
            w_cols.append(p["w0"] @ wih_gm)               # fold fc0: (F, H)
            b_cols.append(p["b0"] @ wih_gm + p["b"][:, g * H:(g + 1) * H])
            blocks.append(whh_gm)
        w_in_g.append(jnp.concatenate(w_cols, axis=1))    # (F, Ht)
        b_in_g.append(jnp.concatenate(b_cols, axis=1))    # (1, Ht)
        whh_g.append(_block_diag(blocks))                 # (Ht, Ht)

    mh = params["mlp_head"]
    # interaction MLP (3 Linear, identity activation) + head -> one Linear (exact).
    w_out = mh["w1"] @ mh["w2"] @ mh["w3"] @ mh["wh"]                         # (Ht, n_t)
    b_out = ((mh["b1"] @ mh["w2"] + mh["b2"]) @ mh["w3"] + mh["b3"]) @ mh["wh"] + mh["bh"]

    return {
        "w_in": jnp.stack(w_in_g).astype(jnp.bfloat16),   # (4, F, Ht)
        "b_in": jnp.stack(b_in_g).astype(jnp.float32),    # (4, 1, Ht)
        "whh": jnp.stack(whh_g).astype(jnp.bfloat16),     # (4, Ht, Ht)
        "w_out": w_out.astype(jnp.bfloat16),              # (Ht, n_targets)
        "b_out": b_out.astype(jnp.float32),               # (1, n_targets)
    }


# ------------------------------ pure-JAX reference ----------------------------
def _lstm_module_ref(x, p):
    B, T, _ = x.shape
    H = p["w0"].shape[1]
    l1 = x @ p["w0"] + p["b0"]                          # (B, T, H)

    def step(carry, xt):
        h, c = carry
        gates = xt @ p["wih"] + h @ p["whh"] + p["b"][0]
        i = jax.nn.sigmoid(gates[:, 0 * H:1 * H])
        f = jax.nn.sigmoid(gates[:, 1 * H:2 * H])
        g = jnp.tanh(gates[:, 2 * H:3 * H])
        o = jax.nn.sigmoid(gates[:, 3 * H:4 * H])
        c = f * c + i * g
        h = o * jnp.tanh(c)
        return (h, c), h

    h0 = jnp.zeros((B, H), jnp.float32)
    _, hs = lax.scan(step, (h0, h0), jnp.transpose(l1, (1, 0, 2)))
    return jnp.transpose(hs, (1, 0, 2))


def modular_lstm_ref(x, params):
    out = jnp.concatenate([_lstm_module_ref(x, params["modules"][k]) for k in MODULES],
                          axis=-1)
    p = params["mlp_head"]
    y = out @ p["w1"] + p["b1"]
    y = y @ p["w2"] + p["b2"]
    y = y @ p["w3"] + p["b3"]
    return y @ p["wh"] + p["bh"]


# ------------------------------ parameter init --------------------------------
def _uniform(key, shape, scale):
    return jax.random.uniform(key, shape, jnp.float32, -scale, scale)


def init_params(key):
    params = {"modules": {}, "mlp_head": {}}
    for name, cfg in MODULES.items():
        H = cfg["hidden_size"]
        key, k0, k1, k2, k3, k4, k5 = jax.random.split(key, 7)
        s_fc = 1.0 / math.sqrt(INPUT_SIZE)
        s_lstm = 1.0 / math.sqrt(H)
        params["modules"][name] = {
            "w0": _uniform(k0, (INPUT_SIZE, H), s_fc),
            "b0": _uniform(k1, (1, H), s_fc),
            "wih": _uniform(k2, (H, 4 * H), s_lstm),
            "whh": _uniform(k3, (H, 4 * H), s_lstm),
            "b": _uniform(k4, (1, 4 * H), s_lstm) + _uniform(k5, (1, 4 * H), s_lstm),
        }
    key, k1, k2, k3, k4, k5, k6, k7, k8 = jax.random.split(key, 9)
    s1 = 1.0 / math.sqrt(TOTAL_HIDDEN)
    s2 = 1.0 / math.sqrt(MLP_HIDDEN)
    sh = 1.0 / math.sqrt(MLP_OUT)
    params["mlp_head"] = {
        "w1": _uniform(k1, (TOTAL_HIDDEN, MLP_HIDDEN), s1),
        "b1": _uniform(k2, (1, MLP_HIDDEN), s1),
        "w2": _uniform(k3, (MLP_HIDDEN, MLP_HIDDEN), s2),
        "b2": _uniform(k4, (1, MLP_HIDDEN), s2),
        "w3": _uniform(k5, (MLP_HIDDEN, MLP_OUT), s2),
        "b3": _uniform(k6, (1, MLP_OUT), s2),
        "wh": _uniform(k7, (MLP_OUT, N_TARGETS), sh),
        "bh": _uniform(k8, (1, N_TARGETS), sh),
    }
    return params


# ----------------------------------- main --------------------------------------
if __name__ == "__main__":
    B, T = 2, 8
    key = jax.random.PRNGKey(0)
    key, kx, kp = jax.random.split(key, 3)
    x = jax.random.normal(kx, (B, T, INPUT_SIZE), jnp.float32)
    params = init_params(kp)

    # Fold/fuse once at param-prep (exact fold; keep it in full f32 precision).
    with jax.default_matmul_precision("highest"):
        fused = fuse_params(params)

    out = modular_lstm_forward(x, fused)
    out = jax.block_until_ready(out)
    assert out.shape == (B, T, N_TARGETS), out.shape

    with jax.default_matmul_precision("highest"):
        ref = modular_lstm_ref(x, params)
    max_err = float(jnp.max(jnp.abs(out - ref)))
    # bf16 MXU matmuls with f32 accumulation vs f32 reference: small rounding drift.
    assert max_err < 5e-2, f"mismatch vs reference: {max_err}"

    print("KERNEL_OK")
</pallas_src>

<mosaic_0001>
module attributes {stable_mosaic.version = 11 : i64} {
  func.func @_modular_lstm_fused_kernel(%arg0: i32, %arg1: memref<2x8x5xf32, #tpu.memory_space<vmem>>, %arg2: memref<4x5x64xbf16, #tpu.memory_space<vmem>>, %arg3: memref<4x1x64xf32, #tpu.memory_space<vmem>>, %arg4: memref<4x64x64xbf16, #tpu.memory_space<vmem>>, %arg5: memref<64x2xbf16, #tpu.memory_space<vmem>>, %arg6: memref<1x2xf32, #tpu.memory_space<vmem>>, %arg7: memref<2x8x2xf32, #tpu.memory_space<vmem>>, %arg8: memref<2x8x64xf32, #tpu.memory_space<vmem>>) attributes {dimension_semantics = [#tpu.dimension_semantics<parallel>], iteration_bounds = array<i64: 1>, scalar_prefetch = 0 : i64, scratch_operands = 1 : i64, tpu.core_type = #tpu.core_type<tc>, window_params = [{transform_indices = @transform_0, window_bounds = array<i64: 2, 8, 5>}, {pipeline_mode = #tpu.pipeline_mode<synchronous>, transform_indices = @transform_1, window_bounds = array<i64: 4, 5, 64>}, {pipeline_mode = #tpu.pipeline_mode<synchronous>, transform_indices = @transform_2, window_bounds = array<i64: 4, 1, 64>}, {pipeline_mode = #tpu.pipeline_mode<synchronous>, transform_indices = @transform_3, window_bounds = array<i64: 4, 64, 64>}, {pipeline_mode = #tpu.pipeline_mode<synchronous>, transform_indices = @transform_4, window_bounds = array<i64: 64, 2>}, {pipeline_mode = #tpu.pipeline_mode<synchronous>, transform_indices = @transform_5, window_bounds = array<i64: 1, 2>}, {transform_indices = @transform_6, window_bounds = array<i64: 2, 8, 2>}]} {
    %c0 = arith.constant 0 : index
    %c0_0 = arith.constant 0 : index
    %c0_1 = arith.constant 0 : index
    %0 = vector.load %arg1[%c0, %c0_0, %c0_1] : memref<2x8x5xf32, #tpu.memory_space<vmem>>, vector<2x8x5xf32>
    %1 = vector.shape_cast %0 : vector<2x8x5xf32> to vector<16x5xf32>
    %2 = arith.truncf %1 : vector<16x5xf32> to vector<16x5xbf16>
    %c0_2 = arith.constant 0 : index
    %c0_3 = arith.constant 0 : index
    %c0_4 = arith.constant 0 : index
    %3 = vector.load %arg2[%c0_2, %c0_3, %c0_4] : memref<4x5x64xbf16, #tpu.memory_space<vmem>>, vector<1x5x64xbf16>
    %4 = vector.shape_cast %3 : vector<1x5x64xbf16> to vector<5x64xbf16>
    %cst = arith.constant dense<0.000000e+00> : vector<16x64xf32>
    %5 = tpu.matmul %2, %4, %cst {dimension_numbers = #tpu.dot_dimension_numbers<[1], [0], [0], [1], [0, 0, 1, 1], [], []>} : vector<16x5xbf16>, vector<5x64xbf16>, vector<16x64xf32> -> vector<16x64xf32>
    %c0_5 = arith.constant 0 : index
    %c0_6 = arith.constant 0 : index
    %c0_7 = arith.constant 0 : index
    %6 = vector.load %arg3[%c0_5, %c0_6, %c0_7] : memref<4x1x64xf32, #tpu.memory_space<vmem>>, vector<1x1x64xf32>
    %7 = vector.shape_cast %6 : vector<1x1x64xf32> to vector<1x64xf32>
    %8 = vector.broadcast %7 : vector<1x64xf32> to vector<16x64xf32>
    %9 = arith.addf %5, %8 : vector<16x64xf32>
    %10 = vector.shape_cast %9 : vector<16x64xf32> to vector<2x8x64xf32>
    %c1 = arith.constant 1 : index
    %c0_8 = arith.constant 0 : index
    %c0_9 = arith.constant 0 : index
    %11 = vector.load %arg2[%c1, %c0_8, %c0_9] : memref<4x5x64xbf16, #tpu.memory_space<vmem>>, vector<1x5x64xbf16>
    %12 = vector.shape_cast %11 : vector<1x5x64xbf16> to vector<5x64xbf16>
    %cst_10 = arith.constant dense<0.000000e+00> : vector<16x64xf32>
    %13 = tpu.matmul %2, %12, %cst_10 {dimension_numbers = #tpu.dot_dimension_numbers<[1], [0], [0], [1], [0, 0, 1, 1], [], []>} : vector<16x5xbf16>, vector<5x64xbf16>, vector<16x64xf32> -> vector<16x64xf32>
    %c1_11 = arith.constant 1 : index
    %c0_12 = arith.constant 0 : index
    %c0_13 = arith.constant 0 : index
    %14 = vector.load %arg3[%c1_11, %c0_12, %c0_13] : memref<4x1x64xf32, #tpu.memory_space<vmem>>, vector<1x1x64xf32>
    %15 = vector.shape_cast %14 : vector<1x1x64xf32> to vector<1x64xf32>
    %16 = vector.broadcast %15 : vector<1x64xf32> to vector<16x64xf32>
    %17 = arith.addf %13, %16 : vector<16x64xf32>
    %18 = vector.shape_cast %17 : vector<16x64xf32> to vector<2x8x64xf32>
    %c2 = arith.constant 2 : index
    %c0_14 = arith.constant 0 : index
    %c0_15 = arith.constant 0 : index
    %19 = vector.load %arg2[%c2, %c0_14, %c0_15] : memref<4x5x64xbf16, #tpu.memory_space<vmem>>, vector<1x5x64xbf16>
    %20 = vector.shape_cast %19 : vector<1x5x64xbf16> to vector<5x64xbf16>
    %cst_16 = arith.constant dense<0.000000e+00> : vector<16x64xf32>
    %21 = tpu.matmul %2, %20, %cst_16 {dimension_numbers = #tpu.dot_dimension_numbers<[1], [0], [0], [1], [0, 0, 1, 1], [], []>} : vector<16x5xbf16>, vector<5x64xbf16>, vector<16x64xf32> -> vector<16x64xf32>
    %c2_17 = arith.constant 2 : index
    %c0_18 = arith.constant 0 : index
    %c0_19 = arith.constant 0 : index
    %22 = vector.load %arg3[%c2_17, %c0_18, %c0_19] : memref<4x1x64xf32, #tpu.memory_space<vmem>>, vector<1x1x64xf32>
    %23 = vector.shape_cast %22 : vector<1x1x64xf32> to vector<1x64xf32>
    %24 = vector.broadcast %23 : vector<1x64xf32> to vector<16x64xf32>
    %25 = arith.addf %21, %24 : vector<16x64xf32>
    %26 = vector.shape_cast %25 : vector<16x64xf32> to vector<2x8x64xf32>
    %c3 = arith.constant 3 : index
    %c0_20 = arith.constant 0 : index
    %c0_21 = arith.constant 0 : index
    %27 = vector.load %arg2[%c3, %c0_20, %c0_21] : memref<4x5x64xbf16, #tpu.memory_space<vmem>>, vector<1x5x64xbf16>
    %28 = vector.shape_cast %27 : vector<1x5x64xbf16> to vector<5x64xbf16>
    %cst_22 = arith.constant dense<0.000000e+00> : vector<16x64xf32>
    %29 = tpu.matmul %2, %28, %cst_22 {dimension_numbers = #tpu.dot_dimension_numbers<[1], [0], [0], [1], [0, 0, 1, 1], [], []>} : vector<16x5xbf16>, vector<5x64xbf16>, vector<16x64xf32> -> vector<16x64xf32>
    %c3_23 = arith.constant 3 : index
    %c0_24 = arith.constant 0 : index
    %c0_25 = arith.constant 0 : index
    %30 = vector.load %arg3[%c3_23, %c0_24, %c0_25] : memref<4x1x64xf32, #tpu.memory_space<vmem>>, vector<1x1x64xf32>
    %31 = vector.shape_cast %30 : vector<1x1x64xf32> to vector<1x64xf32>
    %32 = vector.broadcast %31 : vector<1x64xf32> to vector<16x64xf32>
    %33 = arith.addf %29, %32 : vector<16x64xf32>
    %34 = vector.shape_cast %33 : vector<16x64xf32> to vector<2x8x64xf32>
    %c0_26 = arith.constant 0 : index
    %c0_27 = arith.constant 0 : index
    %c0_28 = arith.constant 0 : index
    %35 = vector.load %arg4[%c0_26, %c0_27, %c0_28] : memref<4x64x64xbf16, #tpu.memory_space<vmem>>, vector<1x64x64xbf16>
    %36 = vector.shape_cast %35 : vector<1x64x64xbf16> to vector<64x64xbf16>
    %c1_29 = arith.constant 1 : index
    %c0_30 = arith.constant 0 : index
    %c0_31 = arith.constant 0 : index
    %37 = vector.load %arg4[%c1_29, %c0_30, %c0_31] : memref<4x64x64xbf16, #tpu.memory_space<vmem>>, vector<1x64x64xbf16>
    %38 = vector.shape_cast %37 : vector<1x64x64xbf16> to vector<64x64xbf16>
    %c2_32 = arith.constant 2 : index
    %c0_33 = arith.constant 0 : index
    %c0_34 = arith.constant 0 : index
    %39 = vector.load %arg4[%c2_32, %c0_33, %c0_34] : memref<4x64x64xbf16, #tpu.memory_space<vmem>>, vector<1x64x64xbf16>
    %40 = vector.shape_cast %39 : vector<1x64x64xbf16> to vector<64x64xbf16>
    %c3_35 = arith.constant 3 : index
    %c0_36 = arith.constant 0 : index
    %c0_37 = arith.constant 0 : index
    %41 = vector.load %arg4[%c3_35, %c0_36, %c0_37] : memref<4x64x64xbf16, #tpu.memory_space<vmem>>, vector<1x64x64xbf16>
    %42 = vector.shape_cast %41 : vector<1x64x64xbf16> to vector<64x64xbf16>
    %cst_38 = arith.constant 0.000000e+00 : f32
    %43 = vector.broadcast %cst_38 : f32 to vector<2x64xf32>
    %cst_39 = arith.constant 0.000000e+00 : f32
    %44 = vector.broadcast %cst_39 : f32 to vector<2x64xf32>
    %45 = arith.truncf %43 : vector<2x64xf32> to vector<2x64xbf16>
    %46 = vector.extract_strided_slice %10 {offsets = [0, 0, 0], sizes = [2, 1, 64], strides = [1, 1, 1]} : vector<2x8x64xf32> to vector<2x1x64xf32>
    %47 = vector.shape_cast %46 : vector<2x1x64xf32> to vector<2x64xf32>
    %cst_40 = arith.constant dense<0.000000e+00> : vector<2x64xf32>
    %48 = tpu.matmul %45, %36, %cst_40 {dimension_numbers = #tpu.dot_dimension_numbers<[1], [0], [0], [1], [0, 0, 1, 1], [], []>} : vector<2x64xbf16>, vector<64x64xbf16>, vector<2x64xf32> -> vector<2x64xf32>
    %49 = arith.addf %47, %48 : vector<2x64xf32>
    %50 = vector.extract_strided_slice %18 {offsets = [0, 0, 0], sizes = [2, 1, 64], strides = [1, 1, 1]} : vector<2x8x64xf32> to vector<2x1x64xf32>
    %51 = vector.shape_cast %50 : vector<2x1x64xf32> to vector<2x64xf32>
    %cst_41 = arith.constant dense<0.000000e+00> : vector<2x64xf32>
    %52 = tpu.matmul %45, %38, %cst_41 {dimension_numbers = #tpu.dot_dimension_numbers<[1], [0], [0], [1], [0, 0, 1, 1], [], []>} : vector<2x64xbf16>, vector<64x64xbf16>, vector<2x64xf32> -> vector<2x64xf32>
    %53 = arith.addf %51, %52 : vector<2x64xf32>
    %54 = vector.extract_strided_slice %26 {offsets = [0, 0, 0], sizes = [2, 1, 64], strides = [1, 1, 1]} : vector<2x8x64xf32> to vector<2x1x64xf32>
    %55 = vector.shape_cast %54 : vector<2x1x64xf32> to vector<2x64xf32>
    %cst_42 = arith.constant dense<0.000000e+00> : vector<2x64xf32>
    %56 = tpu.matmul %45, %40, %cst_42 {dimension_numbers = #tpu.dot_dimension_numbers<[1], [0], [0], [1], [0, 0, 1, 1], [], []>} : vector<2x64xbf16>, vector<64x64xbf16>, vector<2x64xf32> -> vector<2x64xf32>
    %57 = arith.addf %55, %56 : vector<2x64xf32>
    %58 = vector.extract_strided_slice %34 {offsets = [0, 0, 0], sizes = [2, 1, 64], strides = [1, 1, 1]} : vector<2x8x64xf32> to vector<2x1x64xf32>
    %59 = vector.shape_cast %58 : vector<2x1x64xf32> to vector<2x64xf32>
    %cst_43 = arith.constant dense<0.000000e+00> : vector<2x64xf32>
    %60 = tpu.matmul %45, %42, %cst_43 {dimension_numbers = #tpu.dot_dimension_numbers<[1], [0], [0], [1], [0, 0, 1, 1], [], []>} : vector<2x64xbf16>, vector<64x64xbf16>, vector<2x64xf32> -> vector<2x64xf32>
    %61 = arith.addf %59, %60 : vector<2x64xf32>
    %62 = arith.negf %49 : vector<2x64xf32>
    %63 = math.exp %62 : vector<2x64xf32>
    %cst_44 = arith.constant 1.000000e+00 : f32
    %64 = vector.broadcast %cst_44 : f32 to vector<2x64xf32>
    %65 = arith.addf %64, %63 : vector<2x64xf32>
    %66 = arith.divf %64, %65 : vector<2x64xf32>
    %67 = arith.negf %53 : vector<2x64xf32>
    %68 = math.exp %67 : vector<2x64xf32>
    %cst_45 = arith.constant 1.000000e+00 : f32
    %69 = vector.broadcast %cst_45 : f32 to vector<2x64xf32>
    %70 = arith.addf %69, %68 : vector<2x64xf32>
    %71 = arith.divf %69, %70 : vector<2x64xf32>
    %72 = math.tanh %57 : vector<2x64xf32>
    %73 = arith.negf %61 : vector<2x64xf32>
    %74 = math.exp %73 : vector<2x64xf32>
    %cst_46 = arith.constant 1.000000e+00 : f32
    %75 = vector.broadcast %cst_46 : f32 to vector<2x64xf32>
    %76 = arith.addf %75, %74 : vector<2x64xf32>
    %77 = arith.divf %75, %76 : vector<2x64xf32>
    %78 = arith.mulf %71, %44 : vector<2x64xf32>
    %79 = arith.mulf %66, %72 : vector<2x64xf32>
    %80 = arith.addf %78, %79 : vector<2x64xf32>
    %81 = math.tanh %80 : vector<2x64xf32>
    %82 = arith.mulf %77, %81 : vector<2x64xf32>
    %c0_47 = arith.constant 0 : index
    %c0_48 = arith.constant 0 : index
    %c0_49 = arith.constant 0 : index
    %83 = vector.load %arg8[%c0_47, %c0_48, %c0_49] : memref<2x8x64xf32, #tpu.memory_space<vmem>>, vector<2x1x64xf32>
    %84 = vector.shape_cast %83 : vector<2x1x64xf32> to vector<2x64xf32>
    %85 = vector.shape_cast %82 : vector<2x64xf32> to vector<2x1x64xf32>
    tpu.vector_store %arg8[%c0_47, %c0_48, %c0_49], %85 {strides = array<i32>} : memref<2x8x64xf32, #tpu.memory_space<vmem>>, vector<2x1x64xf32>,
    %86 = arith.truncf %82 : vector<2x64xf32> to vector<2x64xbf16>
    %87 = vector.extract_strided_slice %10 {offsets = [0, 1, 0], sizes = [2, 1, 64], strides = [1, 1, 1]} : vector<2x8x64xf32> to vector<2x1x64xf32>
    %88 = vector.shape_cast %87 : vector<2x1x64xf32> to vector<2x64xf32>
    %cst_50 = arith.constant dense<0.000000e+00> : vector<2x64xf32>
    %89 = tpu.matmul %86, %36, %cst_50 {dimension_numbers = #tpu.dot_dimension_numbers<[1], [0], [0], [1], [0, 0, 1, 1], [], []>} : vector<2x64xbf16>, vector<64x64xbf16>, vector<2x64xf32> -> vector<2x64xf32>
    %90 = arith.addf %88, %89 : vector<2x64xf32>
    %91 = vector.extract_strided_slice %18 {offsets = [0, 1, 0], sizes = [2, 1, 64], strides = [1, 1, 1]} : vector<2x8x64xf32> to vector<2x1x64xf32>
    %92 = vector.shape_cast %91 : vector<2x1x64xf32> to vector<2x64xf32>
    %cst_51 = arith.constant dense<0.000000e+00> : vector<2x64xf32>
    %93 = tpu.matmul %86, %38, %cst_51 {dimension_numbers = #tpu.dot_dimension_numbers<[1], [0], [0], [1], [0, 0, 1, 1], [], []>} : vector<2x64xbf16>, vector<64x64xbf16>, vector<2x64xf32> -> vector<2x64xf32>
    %94 = arith.addf %92, %93 : vector<2x64xf32>
    %95 = vector.extract_strided_slice %26 {offsets = [0, 1, 0], sizes = [2, 1, 64], strides = [1, 1, 1]} : vector<2x8x64xf32> to vector<2x1x64xf32>
    %96 = vector.shape_cast %95 : vector<2x1x64xf32> to vector<2x64xf32>
    %cst_52 = arith.constant dense<0.000000e+00> : vector<2x64xf32>
    %97 = tpu.matmul %86, %40, %cst_52 {dimension_numbers = #tpu.dot_dimension_numbers<[1], [0], [0], [1], [0, 0, 1, 1], [], []>} : vector<2x64xbf16>, vector<64x64xbf16>, vector<2x64xf32> -> vector<2x64xf32>
    %98 = arith.addf %96, %97 : vector<2x64xf32>
    %99 = vector.extract_strided_slice %34 {offsets = [0, 1, 0], sizes = [2, 1, 64], strides = [1, 1, 1]} : vector<2x8x64xf32> to vector<2x1x64xf32>
    %100 = vector.shape_cast %99 : vector<2x1x64xf32> to vector<2x64xf32>
    %cst_53 = arith.constant dense<0.000000e+00> : vector<2x64xf32>
    %101 = tpu.matmul %86, %42, %cst_53 {dimension_numbers = #tpu.dot_dimension_numbers<[1], [0], [0], [1], [0, 0, 1, 1], [], []>} : vector<2x64xbf16>, vector<64x64xbf16>, vector<2x64xf32> -> vector<2x64xf32>
    %102 = arith.addf %100, %101 : vector<2x64xf32>
    %103 = arith.negf %90 : vector<2x64xf32>
    %104 = math.exp %103 : vector<2x64xf32>
    %cst_54 = arith.constant 1.000000e+00 : f32
    %105 = vector.broadcast %cst_54 : f32 to vector<2x64xf32>
    %106 = arith.addf %105, %104 : vector<2x64xf32>
    %107 = arith.divf %105, %106 : vector<2x64xf32>
    %108 = arith.negf %94 : vector<2x64xf32>
    %109 = math.exp %108 : vector<2x64xf32>
    %cst_55 = arith.constant 1.000000e+00 : f32
    %110 = vector.broadcast %cst_55 : f32 to vector<2x64xf32>
    %111 = arith.addf %110, %109 : vector<2x64xf32>
    %112 = arith.divf %110, %111 : vector<2x64xf32>
    %113 = math.tanh %98 : vector<2x64xf32>
    %114 = arith.negf %102 : vector<2x64xf32>
    %115 = math.exp %114 : vector<2x64xf32>
    %cst_56 = arith.constant 1.000000e+00 : f32
    %116 = vector.broadcast %cst_56 : f32 to vector<2x64xf32>
    %117 = arith.addf %116, %115 : vector<2x64xf32>
    %118 = arith.divf %116, %117 : vector<2x64xf32>
    %119 = arith.mulf %112, %80 : vector<2x64xf32>
    %120 = arith.mulf %107, %113 : vector<2x64xf32>
    %121 = arith.addf %119, %120 : vector<2x64xf32>
    %122 = math.tanh %121 : vector<2x64xf32>
    %123 = arith.mulf %118, %122 : vector<2x64xf32>
    %c0_57 = arith.constant 0 : index
    %c1_58 = arith.constant 1 : index
    %c0_59 = arith.constant 0 : index
    %124 = vector.load %arg8[%c0_57, %c1_58, %c0_59] : memref<2x8x64xf32, #tpu.memory_space<vmem>>, vector<2x1x64xf32>
    %125 = vector.shape_cast %124 : vector<2x1x64xf32> to vector<2x64xf32>
    %126 = vector.shape_cast %123 : vector<2x64xf32> to vector<2x1x64xf32>
    tpu.vector_store %arg8[%c0_57, %c1_58, %c0_59], %126 {strides = array<i32>} : memref<2x8x64xf32, #tpu.memory_space<vmem>>, vector<2x1x64xf32>,
    %127 = arith.truncf %123 : vector<2x64xf32> to vector<2x64xbf16>
    %128 = vector.extract_strided_slice %10 {offsets = [0, 2, 0], sizes = [2, 1, 64], strides = [1, 1, 1]} : vector<2x8x64xf32> to vector<2x1x64xf32>
    %129 = vector.shape_cast %128 : vector<2x1x64xf32> to vector<2x64xf32>
    %cst_60 = arith.constant dense<0.000000e+00> : vector<2x64xf32>
    %130 = tpu.matmul %127, %36, %cst_60 {dimension_numbers = #tpu.dot_dimension_numbers<[1], [0], [0], [1], [0, 0, 1, 1], [], []>} : vector<2x64xbf16>, vector<64x64xbf16>, vector<2x64xf32> -> vector<2x64xf32>
    %131 = arith.addf %129, %130 : vector<2x64xf32>
    %132 = vector.extract_strided_slice %18 {offsets = [0, 2, 0], sizes = [2, 1, 64], strides = [1, 1, 1]} : vector<2x8x64xf32> to vector<2x1x64xf32>
    %133 = vector.shape_cast %132 : vector<2x1x64xf32> to vector<2x64xf32>
    %cst_61 = arith.constant dense<0.000000e+00> : vector<2x64xf32>
    %134 = tpu.matmul %127, %38, %cst_61 {dimension_numbers = #tpu.dot_dimension_numbers<[1], [0], [0], [1], [0, 0, 1, 1], [], []>} : vector<2x64xbf16>, vector<64x64xbf16>, vector<2x64xf32> -> vector<2x64xf32>
    %135 = arith.addf %133, %134 : vector<2x64xf32>
    %136 = vector.extract_strided_slice %26 {offsets = [0, 2, 0], sizes = [2, 1, 64], strides = [1, 1, 1]} : vector<2x8x64xf32> to vector<2x1x64xf32>
    %137 = vector.shape_cast %136 : vector<2x1x64xf32> to vector<2x64xf32>
    %cst_62 = arith.constant dense<0.000000e+00> : vector<2x64xf32>
    %138 = tpu.matmul %127, %40, %cst_62 {dimension_numbers = #tpu.dot_dimension_numbers<[1], [0], [0], [1], [0, 0, 1, 1], [], []>} : vector<2x64xbf16>, vector<64x64xbf16>, vector<2x64xf32> -> vector<2x64xf32>
    %139 = arith.addf %137, %138 : vector<2x64xf32>
    %140 = vector.extract_strided_slice %34 {offsets = [0, 2, 0], sizes = [2, 1, 64], strides = [1, 1, 1]} : vector<2x8x64xf32> to vector<2x1x64xf32>
    %141 = vector.shape_cast %140 : vector<2x1x64xf32> to vector<2x64xf32>
    %cst_63 = arith.constant dense<0.000000e+00> : vector<2x64xf32>
    %142 = tpu.matmul %127, %42, %cst_63 {dimension_numbers = #tpu.dot_dimension_numbers<[1], [0], [0], [1], [0, 0, 1, 1], [], []>} : vector<2x64xbf16>, vector<64x64xbf16>, vector<2x64xf32> -> vector<2x64xf32>
    %143 = arith.addf %141, %142 : vector<2x64xf32>
    %144 = arith.negf %131 : vector<2x64xf32>
    %145 = math.exp %144 : vector<2x64xf32>
    %cst_64 = arith.constant 1.000000e+00 : f32
    %146 = vector.broadcast %cst_64 : f32 to vector<2x64xf32>
    %147 = arith.addf %146, %145 : vector<2x64xf32>
    %148 = arith.divf %146, %147 : vector<2x64xf32>
    %149 = arith.negf %135 : vector<2x64xf32>
    %150 = math.exp %149 : vector<2x64xf32>
    %cst_65 = arith.constant 1.000000e+00 : f32
    %151 = vector.broadcast %cst_65 : f32 to vector<2x64xf32>
    %152 = arith.addf %151, %150 : vector<2x64xf32>
    %153 = arith.divf %151, %152 : vector<2x64xf32>
    %154 = math.tanh %139 : vector<2x64xf32>
    %155 = arith.negf %143 : vector<2x64xf32>
    %156 = math.exp %155 : vector<2x64xf32>
    %cst_66 = arith.constant 1.000000e+00 : f32
    %157 = vector.broadcast %cst_66 : f32 to vector<2x64xf32>
    %158 = arith.addf %157, %156 : vector<2x64xf32>
    %159 = arith.divf %157, %158 : vector<2x64xf32>
    %160 = arith.mulf %153, %121 : vector<2x64xf32>
    %161 = arith.mulf %148, %154 : vector<2x64xf32>
    %162 = arith.addf %160, %161 : vector<2x64xf32>
    %163 = math.tanh %162 : vector<2x64xf32>
    %164 = arith.mulf %159, %163 : vector<2x64xf32>
    %c0_67 = arith.constant 0 : index
    %c2_68 = arith.constant 2 : index
    %c0_69 = arith.constant 0 : index
    %165 = vector.load %arg8[%c0_67, %c2_68, %c0_69] : memref<2x8x64xf32, #tpu.memory_space<vmem>>, vector<2x1x64xf32>
    %166 = vector.shape_cast %165 : vector<2x1x64xf32> to vector<2x64xf32>
    %167 = vector.shape_cast %164 : vector<2x64xf32> to vector<2x1x64xf32>
    tpu.vector_store %arg8[%c0_67, %c2_68, %c0_69], %167 {strides = array<i32>} : memref<2x8x64xf32, #tpu.memory_space<vmem>>, vector<2x1x64xf32>,
    %168 = arith.truncf %164 : vector<2x64xf32> to vector<2x64xbf16>
    %169 = vector.extract_strided_slice %10 {offsets = [0, 3, 0], sizes = [2, 1, 64], strides = [1, 1, 1]} : vector<2x8x64xf32> to vector<2x1x64xf32>
    %170 = vector.shape_cast %169 : vector<2x1x64xf32> to vector<2x64xf32>
    %cst_70 = arith.constant dense<0.000000e+00> : vector<2x64xf32>
    %171 = tpu.matmul %168, %36, %cst_70 {dimension_numbers = #tpu.dot_dimension_numbers<[1], [0], [0], [1], [0, 0, 1, 1], [], []>} : vector<2x64xbf16>, vector<64x64xbf16>, vector<2x64xf32> -> vector<2x64xf32>
    %172 = arith.addf %170, %171 : vector<2x64xf32>
    %173 = vector.extract_strided_slice %18 {offsets = [0, 3, 0], sizes = [2, 1, 64], strides = [1, 1, 1]} : vector<2x8x64xf32> to vector<2x1x64xf32>
    %174 = vector.shape_cast %173 : vector<2x1x64xf32> to vector<2x64xf32>
    %cst_71 = arith.constant dense<0.000000e+00> : vector<2x64xf32>
    %175 = tpu.matmul %168, %38, %cst_71 {dimension_numbers = #tpu.dot_dimension_numbers<[1], [0], [0], [1], [0, 0, 1, 1], [], []>} : vector<2x64xbf16>, vector<64x64xbf16>, vector<2x64xf32> -> vector<2x64xf32>
    %176 = arith.addf %174, %175 : vector<2x64xf32>
    %177 = vector.extract_strided_slice %26 {offsets = [0, 3, 0], sizes = [2, 1, 64], strides = [1, 1, 1]} : vector<2x8x64xf32> to vector<2x1x64xf32>
    %178 = vector.shape_cast %177 : vector<2x1x64xf32> to vector<2x64xf32>
    %cst_72 = arith.constant dense<0.000000e+00> : vector<2x64xf32>
    %179 = tpu.matmul %168, %40, %cst_72 {dimension_numbers = #tpu.dot_dimension_numbers<[1], [0], [0], [1], [0, 0, 1, 1], [], []>} : vector<2x64xbf16>, vector<64x64xbf16>, vector<2x64xf32> -> vector<2x64xf32>
    %180 = arith.addf %178, %179 : vector<2x64xf32>
    %181 = vector.extract_strided_slice %34 {offsets = [0, 3, 0], sizes = [2, 1, 64], strides = [1, 1, 1]} : vector<2x8x64xf32> to vector<2x1x64xf32>
    %182 = vector.shape_cast %181 : vector<2x1x64xf32> to vector<2x64xf32>
    %cst_73 = arith.constant dense<0.000000e+00> : vector<2x64xf32>
    %183 = tpu.matmul %168, %42, %cst_73 {dimension_numbers = #tpu.dot_dimension_numbers<[1], [0], [0], [1], [0, 0, 1, 1], [], []>} : vector<2x64xbf16>, vector<64x64xbf16>, vector<2x64xf32> -> vector<2x64xf32>
    %184 = arith.addf %182, %183 : vector<2x64xf32>
    %185 = arith.negf %172 : vector<2x64xf32>
    %186 = math.exp %185 : vector<2x64xf32>
    %cst_74 = arith.constant 1.000000e+00 : f32
    %187 = vector.broadcast %cst_74 : f32 to vector<2x64xf32>
    %188 = arith.addf %187, %186 : vector<2x64xf32>
    %189 = arith.divf %187, %188 : vector<2x64xf32>
    %190 = arith.negf %176 : vector<2x64xf32>
    %191 = math.exp %190 : vector<2x64xf32>
    %cst_75 = arith.constant 1.000000e+00 : f32
    %192 = vector.broadcast %cst_75 : f32 to vector<2x64xf32>
    %193 = arith.addf %192, %191 : vector<2x64xf32>
    %194 = arith.divf %192, %193 : vector<2x64xf32>
    %195 = math.tanh %180 : vector<2x64xf32>
    %196 = arith.negf %184 : vector<2x64xf32>
    %197 = math.exp %196 : vector<2x64xf32>
    %cst_76 = arith.constant 1.000000e+00 : f32
    %198 = vector.broadcast %cst_76 : f32 to vector<2x64xf32>
    %199 = arith.addf %198, %197 : vector<2x64xf32>
    %200 = arith.divf %198, %199 : vector<2x64xf32>
    %201 = arith.mulf %194, %162 : vector<2x64xf32>
    %202 = arith.mulf %189, %195 : vector<2x64xf32>
    %203 = arith.addf %201, %202 : vector<2x64xf32>
    %204 = math.tanh %203 : vector<2x64xf32>
    %205 = arith.mulf %200, %204 : vector<2x64xf32>
    %c0_77 = arith.constant 0 : index
    %c3_78 = arith.constant 3 : index
    %c0_79 = arith.constant 0 : index
    %206 = vector.load %arg8[%c0_77, %c3_78, %c0_79] : memref<2x8x64xf32, #tpu.memory_space<vmem>>, vector<2x1x64xf32>
    %207 = vector.shape_cast %206 : vector<2x1x64xf32> to vector<2x64xf32>
    %208 = vector.shape_cast %205 : vector<2x64xf32> to vector<2x1x64xf32>
    tpu.vector_store %arg8[%c0_77, %c3_78, %c0_79], %208 {strides = array<i32>} : memref<2x8x64xf32, #tpu.memory_space<vmem>>, vector<2x1x64xf32>,
    %209 = arith.truncf %205 : vector<2x64xf32> to vector<2x64xbf16>
    %210 = vector.extract_strided_slice %10 {offsets = [0, 4, 0], sizes = [2, 1, 64], strides = [1, 1, 1]} : vector<2x8x64xf32> to vector<2x1x64xf32>
    %211 = vector.shape_cast %210 : vector<2x1x64xf32> to vector<2x64xf32>
    %cst_80 = arith.constant dense<0.000000e+00> : vector<2x64xf32>
    %212 = tpu.matmul %209, %36, %cst_80 {dimension_numbers = #tpu.dot_dimension_numbers<[1], [0], [0], [1], [0, 0, 1, 1], [], []>} : vector<2x64xbf16>, vector<64x64xbf16>, vector<2x64xf32> -> vector<2x64xf32>
    %213 = arith.addf %211, %212 : vector<2x64xf32>
    %214 = vector.extract_strided_slice %18 {offsets = [0, 4, 0], sizes = [2, 1, 64], strides = [1, 1, 1]} : vector<2x8x64xf32> to vector<2x1x64xf32>
    %215 = vector.shape_cast %214 : vector<2x1x64xf32> to vector<2x64xf32>
    %cst_81 = arith.constant dense<0.000000e+00> : vector<2x64xf32>
    %216 = tpu.matmul %209, %38, %cst_81 {dimension_numbers = #tpu.dot_dimension_numbers<[1], [0], [0], [1], [0, 0, 1, 1], [], []>} : vector<2x64xbf16>, vector<64x64xbf16>, vector<2x64xf32> -> vector<2x64xf32>
    %217 = arith.addf %215, %216 : vector<2x64xf32>
    %218 = vector.extract_strided_slice %26 {offsets = [0, 4, 0], sizes = [2, 1, 64], strides = [1, 1, 1]} : vector<2x8x64xf32> to vector<2x1x64xf32>
    %219 = vector.shape_cast %218 : vector<2x1x64xf32> to vector<2x64xf32>
    %cst_82 = arith.constant dense<0.000000e+00> : vector<2x64xf32>
    %220 = tpu.matmul %209, %40, %cst_82 {dimension_numbers = #tpu.dot_dimension_numbers<[1], [0], [0], [1], [0, 0, 1, 1], [], []>} : vector<2x64xbf16>, vector<64x64xbf16>, vector<2x64xf32> -> vector<2x64xf32>
    %221 = arith.addf %219, %220 : vector<2x64xf32>
    %222 = vector.extract_strided_slice %34 {offsets = [0, 4, 0], sizes = [2, 1, 64], strides = [1, 1, 1]} : vector<2x8x64xf32> to vector<2x1x64xf32>
    %223 = vector.shape_cast %222 : vector<2x1x64xf32> to vector<2x64xf32>
    %cst_83 = arith.constant dense<0.000000e+00> : vector<2x64xf32>
    %224 = tpu.matmul %209, %42, %cst_83 {dimension_numbers = #tpu.dot_dimension_numbers<[1], [0], [0], [1], [0, 0, 1, 1], [], []>} : vector<2x64xbf16>, vector<64x64xbf16>, vector<2x64xf32> -> vector<2x64xf32>
    %225 = arith.addf %223, %224 : vector<2x64xf32>
    %226 = arith.negf %213 : vector<2x64xf32>
    %227 = math.exp %226 : vector<2x64xf32>
    %cst_84 = arith.constant 1.000000e+00 : f32
    %228 = vector.broadcast %cst_84 : f32 to vector<2x64xf32>
    %229 = arith.addf %228, %227 : vector<2x64xf32>
    %230 = arith.divf %228, %229 : vector<2x64xf32>
    %231 = arith.negf %217 : vector<2x64xf32>
    %232 = math.exp %231 : vector<2x64xf32>
    %cst_85 = arith.constant 1.000000e+00 : f32
    %233 = vector.broadcast %cst_85 : f32 to vector<2x64xf32>
    %234 = arith.addf %233, %232 : vector<2x64xf32>
    %235 = arith.divf %233, %234 : vector<2x64xf32>
    %236 = math.tanh %221 : vector<2x64xf32>
    %237 = arith.negf %225 : vector<2x64xf32>
    %238 = math.exp %237 : vector<2x64xf32>
    %cst_86 = arith.constant 1.000000e+00 : f32
    %239 = vector.broadcast %cst_86 : f32 to vector<2x64xf32>
    %240 = arith.addf %239, %238 : vector<2x64xf32>
    %241 = arith.divf %239, %240 : vector<2x64xf32>
    %242 = arith.mulf %235, %203 : vector<2x64xf32>
    %243 = arith.mulf %230, %236 : vector<2x64xf32>
    %244 = arith.addf %242, %243 : vector<2x64xf32>
    %245 = math.tanh %244 : vector<2x64xf32>
    %246 = arith.mulf %241, %245 : vector<2x64xf32>
    %c0_87 = arith.constant 0 : index
    %c4 = arith.constant 4 : index
    %c0_88 = arith.constant 0 : index
    %247 = vector.load %arg8[%c0_87, %c4, %c0_88] : memref<2x8x64xf32, #tpu.memory_space<vmem>>, vector<2x1x64xf32>
    %248 = vector.shape_cast %247 : vector<2x1x64xf32> to vector<2x64xf32>
    %249 = vector.shape_cast %246 : vector<2x64xf32> to vector<2x1x64xf32>
    tpu.vector_store %arg8[%c0_87, %c4, %c0_88], %249 {strides = array<i32>} : memref<2x8x64xf32, #tpu.memory_space<vmem>>, vector<2x1x64xf32>,
    %250 = arith.truncf %246 : vector<2x64xf32> to vector<2x64xbf16>
    %251 = vector.extract_strided_slice %10 {offsets = [0, 5, 0], sizes = [2, 1, 64], strides = [1, 1, 1]} : vector<2x8x64xf32> to vector<2x1x64xf32>
    %252 = vector.shape_cast %251 : vector<2x1x64xf32> to vector<2x64xf32>
    %cst_89 = arith.constant dense<0.000000e+00> : vector<2x64xf32>
    %253 = tpu.matmul %250, %36, %cst_89 {dimension_numbers = #tpu.dot_dimension_numbers<[1], [0], [0], [1], [0, 0, 1, 1], [], []>} : vector<2x64xbf16>, vector<64x64xbf16>, vector<2x64xf32> -> vector<2x64xf32>
    %254 = arith.addf %252, %253 : vector<2x64xf32>
    %255 = vector.extract_strided_slice %18 {offsets = [0, 5, 0], sizes = [2, 1, 64], strides = [1, 1, 1]} : vector<2x8x64xf32> to vector<2x1x64xf32>
    %256 = vector.shape_cast %255 : vector<2x1x64xf32> to vector<2x64xf32>
    %cst_90 = arith.constant dense<0.000000e+00> : vector<2x64xf32>
    %257 = tpu.matmul %250, %38, %cst_90 {dimension_numbers = #tpu.dot_dimension_numbers<[1], [0], [0], [1], [0, 0, 1, 1], [], []>} : vector<2x64xbf16>, vector<64x64xbf16>, vector<2x64xf32> -> vector<2x64xf32>
    %258 = arith.addf %256, %257 : vector<2x64xf32>
    %259 = vector.extract_strided_slice %26 {offsets = [0, 5, 0], sizes = [2, 1, 64], strides = [1, 1, 1]} : vector<2x8x64xf32> to vector<2x1x64xf32>
    %260 = vector.shape_cast %259 : vector<2x1x64xf32> to vector<2x64xf32>
    %cst_91 = arith.constant dense<0.000000e+00> : vector<2x64xf32>
    %261 = tpu.matmul %250, %40, %cst_91 {dimension_numbers = #tpu.dot_dimension_numbers<[1], [0], [0], [1], [0, 0, 1, 1], [], []>} : vector<2x64xbf16>, vector<64x64xbf16>, vector<2x64xf32> -> vector<2x64xf32>
    %262 = arith.addf %260, %261 : vector<2x64xf32>
    %263 = vector.extract_strided_slice %34 {offsets = [0, 5, 0], sizes = [2, 1, 64], strides = [1, 1, 1]} : vector<2x8x64xf32> to vector<2x1x64xf32>
    %264 = vector.shape_cast %263 : vector<2x1x64xf32> to vector<2x64xf32>
    %cst_92 = arith.constant dense<0.000000e+00> : vector<2x64xf32>
    %265 = tpu.matmul %250, %42, %cst_92 {dimension_numbers = #tpu.dot_dimension_numbers<[1], [0], [0], [1], [0, 0, 1, 1], [], []>} : vector<2x64xbf16>, vector<64x64xbf16>, vector<2x64xf32> -> vector<2x64xf32>
    %266 = arith.addf %264, %265 : vector<2x64xf32>
    %267 = arith.negf %254 : vector<2x64xf32>
    %268 = math.exp %267 : vector<2x64xf32>
    %cst_93 = arith.constant 1.000000e+00 : f32
    %269 = vector.broadcast %cst_93 : f32 to vector<2x64xf32>
    %270 = arith.addf %269, %268 : vector<2x64xf32>
    %271 = arith.divf %269, %270 : vector<2x64xf32>
    %272 = arith.negf %258 : vector<2x64xf32>
    %273 = math.exp %272 : vector<2x64xf32>
    %cst_94 = arith.constant 1.000000e+00 : f32
    %274 = vector.broadcast %cst_94 : f32 to vector<2x64xf32>
    %275 = arith.addf %274, %273 : vector<2x64xf32>
    %276 = arith.divf %274, %275 : vector<2x64xf32>
    %277 = math.tanh %262 : vector<2x64xf32>
    %278 = arith.negf %266 : vector<2x64xf32>
    %279 = math.exp %278 : vector<2x64xf32>
    %cst_95 = arith.constant 1.000000e+00 : f32
    %280 = vector.broadcast %cst_95 : f32 to vector<2x64xf32>
    %281 = arith.addf %280, %279 : vector<2x64xf32>
    %282 = arith.divf %280, %281 : vector<2x64xf32>
    %283 = arith.mulf %276, %244 : vector<2x64xf32>
    %284 = arith.mulf %271, %277 : vector<2x64xf32>
    %285 = arith.addf %283, %284 : vector<2x64xf32>
    %286 = math.tanh %285 : vector<2x64xf32>
    %287 = arith.mulf %282, %286 : vector<2x64xf32>
    %c0_96 = arith.constant 0 : index
    %c5 = arith.constant 5 : index
    %c0_97 = arith.constant 0 : index
    %288 = vector.load %arg8[%c0_96, %c5, %c0_97] : memref<2x8x64xf32, #tpu.memory_space<vmem>>, vector<2x1x64xf32>
    %289 = vector.shape_cast %288 : vector<2x1x64xf32> to vector<2x64xf32>
    %290 = vector.shape_cast %287 : vector<2x64xf32> to vector<2x1x64xf32>
    tpu.vector_store %arg8[%c0_96, %c5, %c0_97], %290 {strides = array<i32>} : memref<2x8x64xf32, #tpu.memory_space<vmem>>, vector<2x1x64xf32>,
    %291 = arith.truncf %287 : vector<2x64xf32> to vector<2x64xbf16>
    %292 = vector.extract_strided_slice %10 {offsets = [0, 6, 0], sizes = [2, 1, 64], strides = [1, 1, 1]} : vector<2x8x64xf32> to vector<2x1x64xf32>
    %293 = vector.shape_cast %292 : vector<2x1x64xf32> to vector<2x64xf32>
    %cst_98 = arith.constant dense<0.000000e+00> : vector<2x64xf32>
    %294 = tpu.matmul %291, %36, %cst_98 {dimension_numbers = #tpu.dot_dimension_numbers<[1], [0], [0], [1], [0, 0, 1, 1], [], []>} : vector<2x64xbf16>, vector<64x64xbf16>, vector<2x64xf32> -> vector<2x64xf32>
    %295 = arith.addf %293, %294 : vector<2x64xf32>
    %296 = vector.extract_strided_slice %18 {offsets = [0, 6, 0], sizes = [2, 1, 64], strides = [1, 1, 1]} : vector<2x8x64xf32> to vector<2x1x64xf32>
    %297 = vector.shape_cast %296 : vector<2x1x64xf32> to vector<2x64xf32>
    %cst_99 = arith.constant dense<0.000000e+00> : vector<2x64xf32>
    %298 = tpu.matmul %291, %38, %cst_99 {dimension_numbers = #tpu.dot_dimension_numbers<[1], [0], [0], [1], [0, 0, 1, 1], [], []>} : vector<2x64xbf16>, vector<64x64xbf16>, vector<2x64xf32> -> vector<2x64xf32>
    %299 = arith.addf %297, %298 : vector<2x64xf32>
    %300 = vector.extract_strided_slice %26 {offsets = [0, 6, 0], sizes = [2, 1, 64], strides = [1, 1, 1]} : vector<2x8x64xf32> to vector<2x1x64xf32>
    %301 = vector.shape_cast %300 : vector<2x1x64xf32> to vector<2x64xf32>
    %cst_100 = arith.constant dense<0.000000e+00> : vector<2x64xf32>
    %302 = tpu.matmul %291, %40, %cst_100 {dimension_numbers = #tpu.dot_dimension_numbers<[1], [0], [0], [1], [0, 0, 1, 1], [], []>} : vector<2x64xbf16>, vector<64x64xbf16>, vector<2x64xf32> -> vector<2x64xf32>
    %303 = arith.addf %301, %302 : vector<2x64xf32>
    %304 = vector.extract_strided_slice %34 {offsets = [0, 6, 0], sizes = [2, 1, 64], strides = [1, 1, 1]} : vector<2x8x64xf32> to vector<2x1x64xf32>
    %305 = vector.shape_cast %304 : vector<2x1x64xf32> to vector<2x64xf32>
    %cst_101 = arith.constant dense<0.000000e+00> : vector<2x64xf32>
    %306 = tpu.matmul %291, %42, %cst_101 {dimension_numbers = #tpu.dot_dimension_numbers<[1], [0], [0], [1], [0, 0, 1, 1], [], []>} : vector<2x64xbf16>, vector<64x64xbf16>, vector<2x64xf32> -> vector<2x64xf32>
    %307 = arith.addf %305, %306 : vector<2x64xf32>
    %308 = arith.negf %295 : vector<2x64xf32>
    %309 = math.exp %308 : vector<2x64xf32>
    %cst_102 = arith.constant 1.000000e+00 : f32
    %310 = vector.broadcast %cst_102 : f32 to vector<2x64xf32>
    %311 = arith.addf %310, %309 : vector<2x64xf32>
    %312 = arith.divf %310, %311 : vector<2x64xf32>
    %313 = arith.negf %299 : vector<2x64xf32>
    %314 = math.exp %313 : vector<2x64xf32>
    %cst_103 = arith.constant 1.000000e+00 : f32
    %315 = vector.broadcast %cst_103 : f32 to vector<2x64xf32>
    %316 = arith.addf %315, %314 : vector<2x64xf32>
    %317 = arith.divf %315, %316 : vector<2x64xf32>
    %318 = math.tanh %303 : vector<2x64xf32>
    %319 = arith.negf %307 : vector<2x64xf32>
    %320 = math.exp %319 : vector<2x64xf32>
    %cst_104 = arith.constant 1.000000e+00 : f32
    %321 = vector.broadcast %cst_104 : f32 to vector<2x64xf32>
    %322 = arith.addf %321, %320 : vector<2x64xf32>
    %323 = arith.divf %321, %322 : vector<2x64xf32>
    %324 = arith.mulf %317, %285 : vector<2x64xf32>
    %325 = arith.mulf %312, %318 : vector<2x64xf32>
    %326 = arith.addf %324, %325 : vector<2x64xf32>
    %327 = math.tanh %326 : vector<2x64xf32>
    %328 = arith.mulf %323, %327 : vector<2x64xf32>
    %c0_105 = arith.constant 0 : index
    %c6 = arith.constant 6 : index
    %c0_106 = arith.constant 0 : index
    %329 = vector.load %arg8[%c0_105, %c6, %c0_106] : memref<2x8x64xf32, #tpu.memory_space<vmem>>, vector<2x1x64xf32>
    %330 = vector.shape_cast %329 : vector<2x1x64xf32> to vector<2x64xf32>
    %331 = vector.shape_cast %328 : vector<2x64xf32> to vector<2x1x64xf32>
    tpu.vector_store %arg8[%c0_105, %c6, %c0_106], %331 {strides = array<i32>} : memref<2x8x64xf32, #tpu.memory_space<vmem>>, vector<2x1x64xf32>,
    %332 = arith.truncf %328 : vector<2x64xf32> to vector<2x64xbf16>
    %333 = vector.extract_strided_slice %10 {offsets = [0, 7, 0], sizes = [2, 1, 64], strides = [1, 1, 1]} : vector<2x8x64xf32> to vector<2x1x64xf32>
    %334 = vector.shape_cast %333 : vector<2x1x64xf32> to vector<2x64xf32>
    %cst_107 = arith.constant dense<0.000000e+00> : vector<2x64xf32>
    %335 = tpu.matmul %332, %36, %cst_107 {dimension_numbers = #tpu.dot_dimension_numbers<[1], [0], [0], [1], [0, 0, 1, 1], [], []>} : vector<2x64xbf16>, vector<64x64xbf16>, vector<2x64xf32> -> vector<2x64xf32>
    %336 = arith.addf %334, %335 : vector<2x64xf32>
    %337 = vector.extract_strided_slice %18 {offsets = [0, 7, 0], sizes = [2, 1, 64], strides = [1, 1, 1]} : vector<2x8x64xf32> to vector<2x1x64xf32>
    %338 = vector.shape_cast %337 : vector<2x1x64xf32> to vector<2x64xf32>
    %cst_108 = arith.constant dense<0.000000e+00> : vector<2x64xf32>
    %339 = tpu.matmul %332, %38, %cst_108 {dimension_numbers = #tpu.dot_dimension_numbers<[1], [0], [0], [1], [0, 0, 1, 1], [], []>} : vector<2x64xbf16>, vector<64x64xbf16>, vector<2x64xf32> -> vector<2x64xf32>
    %340 = arith.addf %338, %339 : vector<2x64xf32>
    %341 = vector.extract_strided_slice %26 {offsets = [0, 7, 0], sizes = [2, 1, 64], strides = [1, 1, 1]} : vector<2x8x64xf32> to vector<2x1x64xf32>
    %342 = vector.shape_cast %341 : vector<2x1x64xf32> to vector<2x64xf32>
    %cst_109 = arith.constant dense<0.000000e+00> : vector<2x64xf32>
    %343 = tpu.matmul %332, %40, %cst_109 {dimension_numbers = #tpu.dot_dimension_numbers<[1], [0], [0], [1], [0, 0, 1, 1], [], []>} : vector<2x64xbf16>, vector<64x64xbf16>, vector<2x64xf32> -> vector<2x64xf32>
    %344 = arith.addf %342, %343 : vector<2x64xf32>
    %345 = vector.extract_strided_slice %34 {offsets = [0, 7, 0], sizes = [2, 1, 64], strides = [1, 1, 1]} : vector<2x8x64xf32> to vector<2x1x64xf32>
    %346 = vector.shape_cast %345 : vector<2x1x64xf32> to vector<2x64xf32>
    %cst_110 = arith.constant dense<0.000000e+00> : vector<2x64xf32>
    %347 = tpu.matmul %332, %42, %cst_110 {dimension_numbers = #tpu.dot_dimension_numbers<[1], [0], [0], [1], [0, 0, 1, 1], [], []>} : vector<2x64xbf16>, vector<64x64xbf16>, vector<2x64xf32> -> vector<2x64xf32>
    %348 = arith.addf %346, %347 : vector<2x64xf32>
    %349 = arith.negf %336 : vector<2x64xf32>
    %350 = math.exp %349 : vector<2x64xf32>
    %cst_111 = arith.constant 1.000000e+00 : f32
    %351 = vector.broadcast %cst_111 : f32 to vector<2x64xf32>
    %352 = arith.addf %351, %350 : vector<2x64xf32>
    %353 = arith.divf %351, %352 : vector<2x64xf32>
    %354 = arith.negf %340 : vector<2x64xf32>
    %355 = math.exp %354 : vector<2x64xf32>
    %cst_112 = arith.constant 1.000000e+00 : f32
    %356 = vector.broadcast %cst_112 : f32 to vector<2x64xf32>
    %357 = arith.addf %356, %355 : vector<2x64xf32>
    %358 = arith.divf %356, %357 : vector<2x64xf32>
    %359 = math.tanh %344 : vector<2x64xf32>
    %360 = arith.negf %348 : vector<2x64xf32>
    %361 = math.exp %360 : vector<2x64xf32>
    %cst_113 = arith.constant 1.000000e+00 : f32
    %362 = vector.broadcast %cst_113 : f32 to vector<2x64xf32>
    %363 = arith.addf %362, %361 : vector<2x64xf32>
    %364 = arith.divf %362, %363 : vector<2x64xf32>
    %365 = arith.mulf %358, %326 : vector<2x64xf32>
    %366 = arith.mulf %353, %359 : vector<2x64xf32>
    %367 = arith.addf %365, %366 : vector<2x64xf32>
    %368 = math.tanh %367 : vector<2x64xf32>
    %369 = arith.mulf %364, %368 : vector<2x64xf32>
    %c0_114 = arith.constant 0 : index
    %c7 = arith.constant 7 : index
    %c0_115 = arith.constant 0 : index
    %370 = vector.load %arg8[%c0_114, %c7, %c0_115] : memref<2x8x64xf32, #tpu.memory_space<vmem>>, vector<2x1x64xf32>
    %371 = vector.shape_cast %370 : vector<2x1x64xf32> to vector<2x64xf32>
    %372 = vector.shape_cast %369 : vector<2x64xf32> to vector<2x1x64xf32>
    tpu.vector_store %arg8[%c0_114, %c7, %c0_115], %372 {strides = array<i32>} : memref<2x8x64xf32, #tpu.memory_space<vmem>>, vector<2x1x64xf32>,
    %c0_116 = arith.constant 0 : index
    %c0_117 = arith.constant 0 : index
    %c0_118 = arith.constant 0 : index
    %373 = vector.load %arg8[%c0_116, %c0_117, %c0_118] : memref<2x8x64xf32, #tpu.memory_space<vmem>>, vector<2x8x64xf32>
    %374 = vector.shape_cast %373 : vector<2x8x64xf32> to vector<16x64xf32>
    %375 = arith.truncf %374 : vector<16x64xf32> to vector<16x64xbf16>
    %c0_119 = arith.constant 0 : index
    %c0_120 = arith.constant 0 : index
    %376 = vector.load %arg5[%c0_119, %c0_120] : memref<64x2xbf16, #tpu.memory_space<vmem>>, vector<64x2xbf16>
    %cst_121 = arith.constant dense<0.000000e+00> : vector<16x2xf32>
    %377 = tpu.matmul %375, %376, %cst_121 {dimension_numbers = #tpu.dot_dimension_numbers<[1], [0], [0], [1], [0, 0, 1, 1], [], []>} : vector<16x64xbf16>, vector<64x2xbf16>, vector<16x2xf32> -> vector<16x2xf32>
    %c0_122 = arith.constant 0 : index
    %c0_123 = arith.constant 0 : index
    %378 = vector.load %arg6[%c0_122, %c0_123] : memref<1x2xf32, #tpu.memory_space<vmem>>, vector<1x2xf32>
    %379 = vector.broadcast %378 : vector<1x2xf32> to vector<16x2xf32>
    %380 = arith.addf %377, %379 : vector<16x2xf32>
    %381 = vector.shape_cast %380 : vector<16x2xf32> to vector<2x8x2xf32>
    %c0_124 = arith.constant 0 : index
    %c0_125 = arith.constant 0 : index
    %c0_126 = arith.constant 0 : index
    %382 = vector.load %arg7[%c0_124, %c0_125, %c0_126] : memref<2x8x2xf32, #tpu.memory_space<vmem>>, vector<2x8x2xf32>
    tpu.vector_store %arg7[%c0_124, %c0_125, %c0_126], %381 {strides = array<i32>} : memref<2x8x2xf32, #tpu.memory_space<vmem>>, vector<2x8x2xf32>,
    return
  }
  func.func @transform_0(%arg0: i32) -> (i32, i32, i32) {
    %c0_i32 = arith.constant 0 : i32
    %c0_i32_0 = arith.constant 0 : i32
    %c0_i32_1 = arith.constant 0 : i32
    return %arg0, %c0_i32, %c0_i32_0 : i32, i32, i32
  }
  func.func @transform_1(%arg0: i32) -> (i32, i32, i32) {
    %c0_i32 = arith.constant 0 : i32
    %c0_i32_0 = arith.constant 0 : i32
    %c0_i32_1 = arith.constant 0 : i32
    %c0_i32_2 = arith.constant 0 : i32
    return %c0_i32, %c0_i32_0, %c0_i32_1 : i32, i32, i32
  }
  func.func @transform_2(%arg0: i32) -> (i32, i32, i32) {
    %c0_i32 = arith.constant 0 : i32
    %c0_i32_0 = arith.constant 0 : i32
    %c0_i32_1 = arith.constant 0 : i32
    %c0_i32_2 = arith.constant 0 : i32
    return %c0_i32, %c0_i32_0, %c0_i32_1 : i32, i32, i32
  }
  func.func @transform_3(%arg0: i32) -> (i32, i32, i32) {
    %c0_i32 = arith.constant 0 : i32
    %c0_i32_0 = arith.constant 0 : i32
    %c0_i32_1 = arith.constant 0 : i32
    %c0_i32_2 = arith.constant 0 : i32
    return %c0_i32, %c0_i32_0, %c0_i32_1 : i32, i32, i32
  }
  func.func @transform_4(%arg0: i32) -> (i32, i32) {
    %c0_i32 = arith.constant 0 : i32
    %c0_i32_0 = arith.constant 0 : i32
    %c0_i32_1 = arith.constant 0 : i32
    return %c0_i32, %c0_i32_0 : i32, i32
  }
  func.func @transform_5(%arg0: i32) -> (i32, i32) {
    %c0_i32 = arith.constant 0 : i32
    %c0_i32_0 = arith.constant 0 : i32
    %c0_i32_1 = arith.constant 0 : i32
    return %c0_i32, %c0_i32_0 : i32, i32
  }
  func.func @transform_6(%arg0: i32) -> (i32, i32, i32) {
    %c0_i32 = arith.constant 0 : i32
    %c0_i32_0 = arith.constant 0 : i32
    %c0_i32_1 = arith.constant 0 : i32
    return %arg0, %c0_i32, %c0_i32_0 : i32, i32, i32
  }
}

</mosaic_0001>

<llo_original>
// kernel: modular_lstm_forward.1
$region0: #{modular_lstm_forward.1}
  #allocation0 [shape = 'u32[]', space=smem, size = 0x4, offset = 0x4, fixed_abs, tag = 'smem constant byte address 0x4 - core index']
  #allocation1 [shape = 'u32[72,128]{1,0:T(1,128)}', space=vmem, size = 0x9000, scoped, tag = 'internal scratch']
  #allocation2 [shape = 'f32[2,8,64]{2,1,0:T(8,128)}', space=vmem, size = 0x2000, scoped, tag = 'scratch operand']
  %s0 = inlined_call_operand.vmem [shape: f32[2,8,5], index: 0, kind: input, shape index: {}]
  %s1 = inlined_call_operand.vmem [shape: bf16[4,5,64], index: 1, kind: input, shape index: {}]
  %s2 = inlined_call_operand.vmem [shape: f32[4,1,64], index: 2, kind: input, shape index: {}]
  %s3 = inlined_call_operand.hbm [shape: bf16[4,64,64], index: 3, kind: input, shape index: {}]
  %s4 = inlined_call_operand.vmem [shape: bf16[64,2], index: 4, kind: input, shape index: {}]
  %s5 = inlined_call_operand.vmem [shape: f32[1,2], index: 5, kind: input, shape index: {}]
  %s6 = inlined_call_operand.vmem [shape: f32[2,8,2], index: 6, kind: output, shape index: {}]
  %s7 = sld [smem:[#allocation0]]
  $region38: #{modular_lstm_forward.1} parent=0
    _
  %s9 = ssub.s32 1, %s7
  %s10 = scalar_select 0, %s9, %s7
  $region1: #{modular_lstm_forward.1} parent=0
    #allocation3 [shape = 'u8[65536]{0}', space=vmem, size = 0x10000, scoped, tag = 'input window, operand 3, single buffered']
    #allocation4 [shape = 's32[1]{0}', space=sflag, size = 0x4, scoped, tag = 'scoped memory for modular_lstm_forward.1']
    %11 = vsyncpa [#allocation4], 0
    // Predicated region
    $region2: #{modular_lstm_forward.1} parent=1 // pred_check
      _
    $region3: #{modular_lstm_forward.1} parent=1 // pred_check_branch
      %13 = sbr.rel (0) target = $region5
    $region4: #{modular_lstm_forward.1} parent=1 // pred_region
      _
    $region5: #{modular_lstm_forward.1} parent=1 // pred_fallthru
      _
    // Predicated region
    $region6: #{modular_lstm_forward.1} parent=1 // pred_check
      _
    $region7: #{modular_lstm_forward.1} parent=1 // pred_check_branch
      %15 = sbr.rel (0) target = $region9
    $region8: #{modular_lstm_forward.1} parent=1 // pred_region
      _
    $region9: #{modular_lstm_forward.1} parent=1 // pred_fallthru
      _
    // Predicated region
    $region10: #{modular_lstm_forward.1} parent=1 // pred_check
      _
    $region11: #{modular_lstm_forward.1} parent=1 // pred_check_branch
      %17 = sbr.rel (0) target = $region13
    $region12: #{modular_lstm_forward.1} parent=1 // pred_region
      _
    $region13: #{modular_lstm_forward.1} parent=1 // pred_fallthru
      _
    // Predicated region
    $region14: #{modular_lstm_forward.1} parent=1 // pred_check
      _
    $region15: #{modular_lstm_forward.1} parent=1 // pred_check_branch
      %19 = sbr.rel (0) target = $region17
    $region16: #{modular_lstm_forward.1} parent=1 // pred_region
      %21 = vsyncadd [#allocation4], 0
      %s22 = sshll.u32 %s3, 4
      %s23 = int_to_ptr.hbm [resolvable:$true] %s22
      %s24 = sshll.u32 [#allocation3], 4
      %s25 = int_to_ptr.vmem [resolvable:$true] %s24
      %30 = dma.hbm_to_vmem [thread:$0]  %s23, 2048, %s25, [#allocation4], 64, 64, 4
    $region17: #{modular_lstm_forward.1} parent=1 // pred_fallthru
      _
    // Predicated region
    $region18: #{modular_lstm_forward.1} parent=1 // pred_check
      _
    $region19: #{modular_lstm_forward.1} parent=1 // pred_check_branch
      %32 = sbr.rel (0) target = $region21
    $region20: #{modular_lstm_forward.1} parent=1 // pred_region
      _
    $region21: #{modular_lstm_forward.1} parent=1 // pred_fallthru
      _
    // Predicated region
    $region22: #{modular_lstm_forward.1} parent=1 // pred_check
      _
    $region23: #{modular_lstm_forward.1} parent=1 // pred_check_branch
      %34 = sbr.rel (0) target = $region25
    $region24: #{modular_lstm_forward.1} parent=1 // pred_region
      _
    $region25: #{modular_lstm_forward.1} parent=1 // pred_fallthru
      _
    // Predicated region
    $region26: #{modular_lstm_forward.1} parent=1 // pred_check
      _
    $region27: #{modular_lstm_forward.1} parent=1 // pred_check_branch
      %36 = sbr.rel (0) target = $region29
    $region28: #{modular_lstm_forward.1} parent=1 // pred_region
      %38 = dma.done [#allocation4], 2048
    $region29: #{modular_lstm_forward.1} parent=1 // pred_fallthru
      _
    %v40 = vld [vmem:[%s0] sm:$0xff]
    %v41 = vld [vmem:[%s0 + $0x8] sm:$0xff]
    %v42 = vpack.c.bf16 %v41, %v40
    %v43 = vld [vmem:[%s1] sm:$0x7]
    %v44 = vld [vmem:[%s2] sm:$0x1]
    %v46 = vperm.slane %v44, 0
    %vm48 = vcmask 39936
    %v50 = vsel %vm48, %v42, 0
    %vm52 = vcmask 1041408
    %vm53 = vcmask 1042432
    %v54 = vsel %vm52, 4294967295, 65535
    %v55 = vsel %vm53, %v54, 0
    %v57 = vand.u32 %v43, %v55
    %59 = vmatpush.bf16.msra.mxu0 0
    %60 = vmatpush.bf16.msra.mxu0 0
    %61 = vmatpush.bf16.msra.mxu0 0
    %62 = vmatpush.bf16.msra.mxu0 0
    %63 = vmatpush.bf16.msra.mxu0 0
    %64 = vmatpush.bf16.msra.mxu0 0
    %65 = vmatpush.bf16.msra.mxu0 0
    %66 = vmatpush.bf16.msra.mxu0 %v57
    %67 = vmatmul.bf16.gmra.mxu0 %v50
    %v68 = vpop.f32.mrf.mxu0
    %v69 = vadd.f32 %v46, %v68
    %v70 = vpop.f32.mrf.mxu0
    %v71 = vadd.f32 %v46, %v70
    %72 = vdwg.mxu0
    %s73 = scalar_lea.vmem %s1, 4
    %v74 = vld [vmem:[%s73] sm:$0x7]
    %s75 = scalar_lea.vmem %s2, 1
    %v76 = vld [vmem:[%s75] sm:$0x1]
    %v78 = vperm.slane %v76, 0
    %v81 = vand.u32 %v74, %v55
    %83 = vmatpush.bf16.msra.mxu0 0
    %84 = vmatpush.bf16.msra.mxu0 0
    %85 = vmatpush.bf16.msra.mxu0 0
    %86 = vmatpush.bf16.msra.mxu0 0
    %87 = vmatpush.bf16.msra.mxu0 0
    %88 = vmatpush.bf16.msra.mxu0 0
    %89 = vmatpush.bf16.msra.mxu0 0
    %90 = vmatpush.bf16.msra.mxu0 %v81
    %91 = vmatmul.bf16.gmra.mxu0 %v50
    %v92 = vpop.f32.mrf.mxu0
    %v93 = vadd.f32 %v78, %v92
    %v94 = vpop.f32.mrf.mxu0
    %v95 = vadd.f32 %v78, %v94
    %96 = vdwg.mxu0
    %s97 = scalar_lea.vmem %s1, 8
    %v98 = vld [vmem:[%s97] sm:$0x7]
    %s99 = scalar_lea.vmem %s2, 2
    %v100 = vld [vmem:[%s99] sm:$0x1]
    %v102 = vperm.slane %v100, 0
    %v105 = vand.u32 %v98, %v55
    %107 = vmatpush.bf16.msra.mxu0 0
    %108 = vmatpush.bf16.msra.mxu0 0
    %109 = vmatpush.bf16.msra.mxu0 0
    %110 = vmatpush.bf16.msra.mxu0 0
    %111 = vmatpush.bf16.msra.mxu0 0
    %112 = vmatpush.bf16.msra.mxu0 0
    %113 = vmatpush.bf16.msra.mxu0 0
    %114 = vmatpush.bf16.msra.mxu0 %v105
    %115 = vmatmul.bf16.gmra.mxu0 %v50
    %v116 = vpop.f32.mrf.mxu0
    %v117 = vadd.f32 %v102, %v116
    %v118 = vpop.f32.mrf.mxu0
    %v119 = vadd.f32 %v102, %v118
    %120 = vdwg.mxu0
    %s121 = scalar_lea.vmem %s1, 12
    %v122 = vld [vmem:[%s121] sm:$0x7]
    %s123 = scalar_lea.vmem %s2, 3
    %v124 = vld [vmem:[%s123] sm:$0x1]
    %v126 = vperm.slane %v124, 0
    %v129 = vand.u32 %v122, %v55
    %131 = vmatpush.bf16.msra.mxu0 0
    %132 = vmatpush.bf16.msra.mxu0 0
    %133 = vmatpush.bf16.msra.mxu0 0
    %134 = vmatpush.bf16.msra.mxu0 0
    %135 = vmatpush.bf16.msra.mxu0 0
    %136 = vmatpush.bf16.msra.mxu0 0
    %137 = vmatpush.bf16.msra.mxu0 0
    %138 = vmatpush.bf16.msra.mxu0 %v129
    %139 = vmatmul.bf16.gmra.mxu0 %v50
    %v140 = vpop.f32.mrf.mxu0
    %v141 = vadd.f32 %v126, %v140
    %v142 = vpop.f32.mrf.mxu0
    %v143 = vadd.f32 %v126, %v142
    %144 = vdwg.mxu0
    %v145 = vld [vmem:[#allocation3] sm:$0xf]
    %v146 = vld [vmem:[#allocation3 + $0x4] sm:$0xf]
    %v147 = vld [vmem:[#allocation3 + $0x8] sm:$0xf]
    %v148 = vld [vmem:[#allocation3 + $0xc] sm:$0xf]
    %v149 = vld [vmem:[#allocation3 + $0x10] sm:$0xf]
    %v150 = vld [vmem:[#allocation3 + $0x14] sm:$0xf]
    %v151 = vld [vmem:[#allocation3 + $0x18] sm:$0xf]
    %v152 = vld [vmem:[#allocation3 + $0x1c] sm:$0xf]
    %s153 = scalar_lea.vmem [#allocation3], 32
    %v154 = vld [vmem:[%s153] sm:$0xf]
    %v155 = vld [vmem:[%s153 + $0x4] sm:$0xf]
    %v156 = vld [vmem:[%s153 + $0x8] sm:$0xf]
    %v157 = vld [vmem:[%s153 + $0xc] sm:$0xf]
    %v158 = vld [vmem:[%s153 + $0x10] sm:$0xf]
    %v159 = vld [vmem:[%s153 + $0x14] sm:$0xf]
    %v160 = vld [vmem:[%s153 + $0x18] sm:$0xf]
    %v161 = vld [vmem:[%s153 + $0x1c] sm:$0xf]
    %s162 = scalar_lea.vmem [#allocation3], 64
    %v163 = vld [vmem:[%s162] sm:$0xf]
    %v164 = vld [vmem:[%s162 + $0x4] sm:$0xf]
    %v165 = vld [vmem:[%s162 + $0x8] sm:$0xf]
    %v166 = vld [vmem:[%s162 + $0xc] sm:$0xf]
    %v167 = vld [vmem:[%s162 + $0x10] sm:$0xf]
    %v168 = vld [vmem:[%s162 + $0x14] sm:$0xf]
    %v169 = vld [vmem:[%s162 + $0x18] sm:$0xf]
    %v170 = vld [vmem:[%s162 + $0x1c] sm:$0xf]
    %s171 = scalar_lea.vmem [#allocation3], 96
    %v172 = vld [vmem:[%s171] sm:$0xf]
    %v173 = vld [vmem:[%s171 + $0x4] sm:$0xf]
    %v174 = vld [vmem:[%s171 + $0x8] sm:$0xf]
    %v175 = vld [vmem:[%s171 + $0xc] sm:$0xf]
    %v176 = vld [vmem:[%s171 + $0x10] sm:$0xf]
    %v177 = vld [vmem:[%s171 + $0x14] sm:$0xf]
    %v178 = vld [vmem:[%s171 + $0x18] sm:$0xf]
    %v179 = vld [vmem:[%s171 + $0x1c] sm:$0xf]
    %v188 = vunpack.c.l.b16 %v145
    %v189 = vunpack.c.l.b16 %v146
    %v190 = vunpack.c.l.b16 %v147
    %v191 = vunpack.c.l.b16 %v148
    %v192 = vunpack.c.l.b16 %v149
    %v193 = vunpack.c.l.b16 %v150
    %v194 = vunpack.c.l.b16 %v151
    %v195 = vunpack.c.l.b16 %v152
    %v196 = vpack.c.b16 %v189, %v188
    %v197 = vpack.c.b16 %v191, %v190
    %v198 = vpack.c.b16 %v193, %v192
    %v199 = vpack.c.b16 %v195, %v194
    %vm204 = vcmask 523264
    %v206 = vsel %vm204, 0, 0
    %208 = vmatpush.bf16.msra.mxu0 0
    %209 = vmatpush.bf16.msra.mxu0 0
    %210 = vmatpush.bf16.msra.mxu0 0
    %211 = vmatpush.bf16.msra.mxu0 0
    %212 = vmatpush.bf16.msra.mxu0 %v199
    %213 = vmatpush.bf16.msra.mxu0 %v198
    %214 = vmatpush.bf16.msra.mxu0 %v197
    %215 = vmatpush.bf16.msra.mxu0 %v196
    %216 = vmatmul.bf16.gmra.mxu0 %v206
    %v217 = vpop.f32.mrf.mxu0
    %v218 = vadd.f32 0.0, %v217
    %v219 = vpop.f32.mrf.mxu0
    %220 = vdwg.mxu0
    %v222 = vrot.slane %v218, 1
    %v225 = vadd.f32 %v69, %v218
    %v226 = vadd.f32 %v71, %v222
    %v235 = vunpack.c.l.b16 %v154
    %v236 = vunpack.c.l.b16 %v155
    %v237 = vunpack.c.l.b16 %v156
    %v238 = vunpack.c.l.b16 %v157
    %v239 = vunpack.c.l.b16 %v158
    %v240 = vunpack.c.l.b16 %v159
    %v241 = vunpack.c.l.b16 %v160
    %v242 = vunpack.c.l.b16 %v161
    %v243 = vpack.c.b16 %v236, %v235
    %v244 = vpack.c.b16 %v238, %v237
    %v245 = vpack.c.b16 %v240, %v239
    %v246 = vpack.c.b16 %v242, %v241
    %251 = vmatpush.bf16.msra.mxu0 0
    %252 = vmatpush.bf16.msra.mxu0 0
    %253 = vmatpush.bf16.msra.mxu0 0
    %254 = vmatpush.bf16.msra.mxu0 0
    %255 = vmatpush.bf16.msra.mxu0 %v246
    %256 = vmatpush.bf16.msra.mxu0 %v245
    %257 = vmatpush.bf16.msra.mxu0 %v244
    %258 = vmatpush.bf16.msra.mxu0 %v243
    %259 = vmatmul.bf16.gmra.mxu0 %v206
    %v260 = vpop.f32.mrf.mxu0
    %v261 = vadd.f32 0.0, %v260
    %v262 = vpop.f32.mrf.mxu0
    %263 = vdwg.mxu0
    %v265 = vrot.slane %v261, 1
    %v268 = vadd.f32 %v93, %v261
    %v269 = vadd.f32 %v95, %v265
    %v278 = vunpack.c.l.b16 %v163
    %v279 = vunpack.c.l.b16 %v164
    %v280 = vunpack.c.l.b16 %v165
    %v281 = vunpack.c.l.b16 %v166
    %v282 = vunpack.c.l.b16 %v167
    %v283 = vunpack.c.l.b16 %v168
    %v284 = vunpack.c.l.b16 %v169
    %v285 = vunpack.c.l.b16 %v170
    %v286 = vpack.c.b16 %v279, %v278
    %v287 = vpack.c.b16 %v281, %v280
    %v288 = vpack.c.b16 %v283, %v282
    %v289 = vpack.c.b16 %v285, %v284
    %294 = vmatpush.bf16.msra.mxu0 0
    %295 = vmatpush.bf16.msra.mxu0 0
    %296 = vmatpush.bf16.msra.mxu0 0
    %297 = vmatpush.bf16.msra.mxu0 0
    %298 = vmatpush.bf16.msra.mxu0 %v289
    %299 = vmatpush.bf16.msra.mxu0 %v288
    %300 = vmatpush.bf16.msra.mxu0 %v287
    %301 = vmatpush.bf16.msra.mxu0 %v286
    %302 = vmatmul.bf16.gmra.mxu0 %v206
    %v303 = vpop.f32.mrf.mxu0
    %v304 = vadd.f32 0.0, %v303
    %v305 = vpop.f32.mrf.mxu0
    %306 = vdwg.mxu0
    %v308 = vrot.slane %v304, 1
    %v311 = vadd.f32 %v117, %v304
    %v312 = vadd.f32 %v119, %v308
    %v321 = vunpack.c.l.b16 %v172
    %v322 = vunpack.c.l.b16 %v173
    %v323 = vunpack.c.l.b16 %v174
    %v324 = vunpack.c.l.b16 %v175
    %v325 = vunpack.c.l.b16 %v176
    %v326 = vunpack.c.l.b16 %v177
    %v327 = vunpack.c.l.b16 %v178
    %v328 = vunpack.c.l.b16 %v179
    %v329 = vpack.c.b16 %v322, %v321
    %v330 = vpack.c.b16 %v324, %v323
    %v331 = vpack.c.b16 %v326, %v325
    %v332 = vpack.c.b16 %v328, %v327
    %337 = vmatpush.bf16.msra.mxu0 0
    %338 = vmatpush.bf16.msra.mxu0 0
    %339 = vmatpush.bf16.msra.mxu0 0
    %340 = vmatpush.bf16.msra.mxu0 0
    %341 = vmatpush.bf16.msra.mxu0 %v332
    %342 = vmatpush.bf16.msra.mxu0 %v331
    %343 = vmatpush.bf16.msra.mxu0 %v330
    %344 = vmatpush.bf16.msra.mxu0 %v329
    %345 = vmatmul.bf16.gmra.mxu0 %v206
    %v346 = vpop.f32.mrf.mxu0
    %v347 = vadd.f32 0.0, %v346
    %v348 = vpop.f32.mrf.mxu0
    %349 = vdwg.mxu0
    %v351 = vrot.slane %v347, 1
    %v354 = vadd.f32 %v141, %v347
    %v355 = vadd.f32 %v143, %v351
    %v356 = vxor.u32 %v225, 2147483648
    %v357 = vxor.u32 %v226, 2147483648
    %v358 = vmul.f32 %v356, 1.442695
    %v359 = vpow.pop %v358
    %v360 = vmul.f32 %v357, 1.442695
    %v361 = vpow.pop %v360
    %v362 = vadd.f32 %v359, 1.0
    %v363 = vadd.f32 %v361, 1.0
    %v364 = vrcp.pop %v362
    %v365 = vmul.f32 %v362, %v364
    %v366 = vsub.f32 1.0, %v365
    %v367 = vmul.f32 %v364, %v366
    %v368 = vadd.f32 %v364, %v367
    %vm369 = vweird.f32 %v362
    %vm370 = vweird.f32 %v364
    %vm371 = vmor %vm369, %vm370
    %v372 = vsel %vm371, %v364, %v368
    %v373 = vand.u32 2147483647, %v362
    %vm374 = vcmp.eq.f32.partialorder %v373, 8.507059e+37
    %v375 = vand.u32 %v362, 2147483648
    %v376 = vor.u32 1.1754944e-38, %v375
    %v377 = vsel %vm374, %v376, %v372
    %v378 = vmul.f32 1.0, %v377
    %v379 = vrcp.pop %v363
    %v380 = vmul.f32 %v363, %v379
    %v381 = vsub.f32 1.0, %v380
    %v382 = vmul.f32 %v379, %v381
    %v383 = vadd.f32 %v379, %v382
    %vm384 = vweird.f32 %v363
    %vm385 = vweird.f32 %v379
    %vm386 = vmor %vm384, %vm385
    %v387 = vsel %vm386, %v379, %v383
    %v388 = vand.u32 2147483647, %v363
    %vm389 = vcmp.eq.f32.partialorder %v388, 8.507059e+37
    %v390 = vand.u32 %v363, 2147483648
    %v391 = vor.u32 1.1754944e-38, %v390
    %v392 = vsel %vm389, %v391, %v387
    %v393 = vmul.f32 1.0, %v392
    %v394 = vxor.u32 %v268, 2147483648
    %v395 = vxor.u32 %v269, 2147483648
    %v396 = vmul.f32 %v394, 1.442695
    %v397 = vpow.pop %v396
    %v398 = vmul.f32 %v395, 1.442695
    %v399 = vpow.pop %v398
    %v400 = vadd.f32 %v397, 1.0
    %v401 = vadd.f32 %v399, 1.0
    %v402 = vrcp.pop %v400
    %v403 = vmul.f32 %v400, %v402
    %v404 = vsub.f32 1.0, %v403
    %v405 = vmul.f32 %v402, %v404
    %v406 = vadd.f32 %v402, %v405
    %vm407 = vweird.f32 %v400
    %vm408 = vweird.f32 %v402
    %vm409 = vmor %vm407, %vm408
    %v410 = vsel %vm409, %v402, %v406
    %v411 = vand.u32 2147483647, %v400
    %vm412 = vcmp.eq.f32.partialorder %v411, 8.507059e+37
    %v413 = vand.u32 %v400, 2147483648
    %v414 = vor.u32 1.1754944e-38, %v413
    %v415 = vsel %vm412, %v414, %v410
    %v416 = vmul.f32 1.0, %v415
    %v417 = vrcp.pop %v401
    %v418 = vmul.f32 %v401, %v417
    %v419 = vsub.f32 1.0, %v418
    %v420 = vmul.f32 %v417, %v419
    %v421 = vadd.f32 %v417, %v420
    %vm422 = vweird.f32 %v401
    %vm423 = vweird.f32 %v417
    %vm424 = vmor %vm422, %vm423
    %v425 = vsel %vm424, %v417, %v421
    %v426 = vand.u32 2147483647, %v401
    %vm427 = vcmp.eq.f32.partialorder %v426, 8.507059e+37
    %v428 = vand.u32 %v401, 2147483648
    %v429 = vor.u32 1.1754944e-38, %v428
    %v430 = vsel %vm427, %v429, %v425
    %v431 = vmul.f32 1.0, %v430
    %v432 = vtanh.pop %v311
    %v433 = vtanh.pop %v312
    %v434 = vxor.u32 %v354, 2147483648
    %v435 = vxor.u32 %v355, 2147483648
    %v436 = vmul.f32 %v434, 1.442695
    %v437 = vpow.pop %v436
    %v438 = vmul.f32 %v435, 1.442695
    %v439 = vpow.pop %v438
    %v440 = vadd.f32 %v437, 1.0
    %v441 = vadd.f32 %v439, 1.0
    %v442 = vrcp.pop %v440
    %v443 = vmul.f32 %v440, %v442
    %v444 = vsub.f32 1.0, %v443
    %v445 = vmul.f32 %v442, %v444
    %v446 = vadd.f32 %v442, %v445
    %vm447 = vweird.f32 %v440
    %vm448 = vweird.f32 %v442
    %vm449 = vmor %vm447, %vm448
    %v450 = vsel %vm449, %v442, %v446
    %v451 = vand.u32 2147483647, %v440
    %vm452 = vcmp.eq.f32.partialorder %v451, 8.507059e+37
    %v453 = vand.u32 %v440, 2147483648
    %v454 = vor.u32 1.1754944e-38, %v453
    %v455 = vsel %vm452, %v454, %v450
    %v456 = vmul.f32 1.0, %v455
    %v457 = vrcp.pop %v441
    %v458 = vmul.f32 %v441, %v457
    %v459 = vsub.f32 1.0, %v458
    %v460 = vmul.f32 %v457, %v459
    %v461 = vadd.f32 %v457, %v460
    %vm462 = vweird.f32 %v441
    %vm463 = vweird.f32 %v457
    %vm464 = vmor %vm462, %vm463
    %v465 = vsel %vm464, %v457, %v461
    %v466 = vand.u32 2147483647, %v441
    %vm467 = vcmp.eq.f32.partialorder %v466, 8.507059e+37
    %v468 = vand.u32 %v441, 2147483648
    %v469 = vor.u32 1.1754944e-38, %v468
    %v470 = vsel %vm467, %v469, %v465
    %v471 = vmul.f32 1.0, %v470
    %v472 = vmul.f32 %v416, 0.0
    %v473 = vmul.f32 %v431, 0.0
    %v474 = vmul.f32 %v378, %v432
    %v475 = vmul.f32 %v393, %v433
    %v476 = vadd.f32 %v472, %v474
    %v477 = vadd.f32 %v473, %v475
    %v478 = vtanh.pop %v476
    %v479 = vtanh.pop %v477
    %v480 = vmul.f32 %v456, %v478
    %v481 = vmul.f32 %v471, %v479
    %vm482 = vcmask 516096
    %483 = vst.msk [vmem:[#allocation2] sm:$0x1] %vm482, %v480
    %484 = vst.msk [vmem:[#allocation2 + $0x8] sm:$0x1] %vm482, %v481
    %v485 = vpack.c.bf16 %v480, %v480
    %v486 = vpack.c.bf16 %v481, %v481
    %v489 = vunpack.c.l.b16 %v485
    %v490 = vunpack.c.l.b16 %v486
    %v491 = vrot.slane %v490, 7
    %vm492 = vcmask 1041409
    %v493 = vsel %vm492, %v491, %v489
    %v494 = vpack.c.b16 %v493, %v493
    %v496 = vsel %vm204, %v494, 0
    %498 = vmatpush.bf16.msra.mxu0 0
    %499 = vmatpush.bf16.msra.mxu0 0
    %500 = vmatpush.bf16.msra.mxu0 0
    %501 = vmatpush.bf16.msra.mxu0 0
    %502 = vmatpush.bf16.msra.mxu0 %v199
    %503 = vmatpush.bf16.msra.mxu0 %v198
    %504 = vmatpush.bf16.msra.mxu0 %v197
    %505 = vmatpush.bf16.msra.mxu0 %v196
    %506 = vmatmul.bf16.gmra.mxu0 %v496
    %v507 = vpop.f32.mrf.mxu0
    %v508 = vadd.f32 0.0, %v507
    %v509 = vpop.f32.mrf.mxu0
    %510 = vdwg.mxu0
    %v512 = vrot.slane %v508, 7
    %v515 = vadd.f32 %v69, %v512
    %v516 = vadd.f32 %v71, %v508
    %517 = vmatpush.bf16.msra.mxu0 0
    %518 = vmatpush.bf16.msra.mxu0 0
    %519 = vmatpush.bf16.msra.mxu0 0
    %520 = vmatpush.bf16.msra.mxu0 0
    %521 = vmatpush.bf16.msra.mxu0 %v246
    %522 = vmatpush.bf16.msra.mxu0 %v245
    %523 = vmatpush.bf16.msra.mxu0 %v244
    %524 = vmatpush.bf16.msra.mxu0 %v243
    %525 = vmatmul.bf16.gmra.mxu0 %v496
    %v526 = vpop.f32.mrf.mxu0
    %v527 = vadd.f32 0.0, %v526
    %v528 = vpop.f32.mrf.mxu0
    %529 = vdwg.mxu0
    %v531 = vrot.slane %v527, 7
    %v534 = vadd.f32 %v93, %v531
    %v535 = vadd.f32 %v95, %v527
    %536 = vmatpush.bf16.msra.mxu0 0
    %537 = vmatpush.bf16.msra.mxu0 0
    %538 = vmatpush.bf16.msra.mxu0 0
    %539 = vmatpush.bf16.msra.mxu0 0
    %540 = vmatpush.bf16.msra.mxu0 %v289
    %541 = vmatpush.bf16.msra.mxu0 %v288
    %542 = vmatpush.bf16.msra.mxu0 %v287
    %543 = vmatpush.bf16.msra.mxu0 %v286
    %544 = vmatmul.bf16.gmra.mxu0 %v496
    %v545 = vpop.f32.mrf.mxu0
    %v546 = vadd.f32 0.0, %v545
    %v547 = vpop.f32.mrf.mxu0
    %548 = vdwg.mxu0
    %v550 = vrot.slane %v546, 7
    %v553 = vadd.f32 %v117, %v550
    %v554 = vadd.f32 %v119, %v546
    %555 = vmatpush.bf16.msra.mxu0 0
    %556 = vmatpush.bf16.msra.mxu0 0
    %557 = vmatpush.bf16.msra.mxu0 0
    %558 = vmatpush.bf16.msra.mxu0 0
    %559 = vmatpush.bf16.msra.mxu0 %v332
    %560 = vmatpush.bf16.msra.mxu0 %v331
    %561 = vmatpush.bf16.msra.mxu0 %v330
    %562 = vmatpush.bf16.msra.mxu0 %v329
    %563 = vmatmul.bf16.gmra.mxu0 %v496
    %v564 = vpop.f32.mrf.mxu0
    %v565 = vadd.f32 0.0, %v564
    %v566 = vpop.f32.mrf.mxu0
    %567 = vdwg.mxu0
    %v569 = vrot.slane %v565, 7
    %v572 = vadd.f32 %v141, %v569
    %v573 = vadd.f32 %v143, %v565
    %v574 = vxor.u32 %v515, 2147483648
    %v575 = vxor.u32 %v516, 2147483648
    %v576 = vmul.f32 %v574, 1.442695
    %v577 = vpow.pop %v576
    %v578 = vmul.f32 %v575, 1.442695
    %v579 = vpow.pop %v578
    %v580 = vadd.f32 %v577, 1.0
    %v581 = vadd.f32 %v579, 1.0
    %v582 = vrcp.pop %v580
    %v583 = vmul.f32 %v580, %v582
    %v584 = vsub.f32 1.0, %v583
    %v585 = vmul.f32 %v582, %v584
    %v586 = vadd.f32 %v582, %v585
    %vm587 = vweird.f32 %v580
    %vm588 = vweird.f32 %v582
    %vm589 = vmor %vm587, %vm588
    %v590 = vsel %vm589, %v582, %v586
    %v591 = vand.u32 2147483647, %v580
    %vm592 = vcmp.eq.f32.partialorder %v591, 8.507059e+37
    %v593 = vand.u32 %v580, 2147483648
    %v594 = vor.u32 1.1754944e-38, %v593
    %v595 = vsel %vm592, %v594, %v590
    %v596 = vmul.f32 1.0, %v595
    %v597 = vrcp.pop %v581
    %v598 = vmul.f32 %v581, %v597
    %v599 = vsub.f32 1.0, %v598
    %v600 = vmul.f32 %v597, %v599
    %v601 = vadd.f32 %v597, %v600
    %vm602 = vweird.f32 %v581
    %vm603 = vweird.f32 %v597
    %vm604 = vmor %vm602, %vm603
    %v605 = vsel %vm604, %v597, %v601
    %v606 = vand.u32 2147483647, %v581
    %vm607 = vcmp.eq.f32.partialorder %v606, 8.507059e+37
    %v608 = vand.u32 %v581, 2147483648
    %v609 = vor.u32 1.1754944e-38, %v608
    %v610 = vsel %vm607, %v609, %v605
    %v611 = vmul.f32 1.0, %v610
    %v612 = vxor.u32 %v534, 2147483648
    %v613 = vxor.u32 %v535, 2147483648
    %v614 = vmul.f32 %v612, 1.442695
    %v615 = vpow.pop %v614
    %v616 = vmul.f32 %v613, 1.442695
    %v617 = vpow.pop %v616
    %v618 = vadd.f32 %v615, 1.0
    %v619 = vadd.f32 %v617, 1.0
    %v620 = vrcp.pop %v618
    %v621 = vmul.f32 %v618, %v620
    %v622 = vsub.f32 1.0, %v621
    %v623 = vmul.f32 %v620, %v622
    %v624 = vadd.f32 %v620, %v623
    %vm625 = vweird.f32 %v618
    %vm626 = vweird.f32 %v620
    %vm627 = vmor %vm625, %vm626
    %v628 = vsel %vm627, %v620, %v624
    %v629 = vand.u32 2147483647, %v618
    %vm630 = vcmp.eq.f32.partialorder %v629, 8.507059e+37
    %v631 = vand.u32 %v618, 2147483648
    %v632 = vor.u32 1.1754944e-38, %v631
    %v633 = vsel %vm630, %v632, %v628
    %v634 = vmul.f32 1.0, %v633
    %v635 = vrcp.pop %v619
    %v636 = vmul.f32 %v619, %v635
    %v637 = vsub.f32 1.0, %v636
    %v638 = vmul.f32 %v635, %v637
    %v639 = vadd.f32 %v635, %v638
    %vm640 = vweird.f32 %v619
    %vm641 = vweird.f32 %v635
    %vm642 = vmor %vm640, %vm641
    %v643 = vsel %vm642, %v635, %v639
    %v644 = vand.u32 2147483647, %v619
    %vm645 = vcmp.eq.f32.partialorder %v644, 8.507059e+37
    %v646 = vand.u32 %v619, 2147483648
    %v647 = vor.u32 1.1754944e-38, %v646
    %v648 = vsel %vm645, %v647, %v643
    %v649 = vmul.f32 1.0, %v648
    %v650 = vtanh.pop %v553
    %v651 = vtanh.pop %v554
    %v652 = vxor.u32 %v572, 2147483648
    %v653 = vxor.u32 %v573, 2147483648
    %v654 = vmul.f32 %v652, 1.442695
    %v655 = vpow.pop %v654
    %v656 = vmul.f32 %v653, 1.442695
    %v657 = vpow.pop %v656
    %v658 = vadd.f32 %v655, 1.0
    %v659 = vadd.f32 %v657, 1.0
    %v660 = vrcp.pop %v658
    %v661 = vmul.f32 %v658, %v660
    %v662 = vsub.f32 1.0, %v661
    %v663 = vmul.f32 %v660, %v662
    %v664 = vadd.f32 %v660, %v663
    %vm665 = vweird.f32 %v658
    %vm666 = vweird.f32 %v660
    %vm667 = vmor %vm665, %vm666
    %v668 = vsel %vm667, %v660, %v664
    %v669 = vand.u32 2147483647, %v658
    %vm670 = vcmp.eq.f32.partialorder %v669, 8.507059e+37
    %v671 = vand.u32 %v658, 2147483648
    %v672 = vor.u32 1.1754944e-38, %v671
    %v673 = vsel %vm670, %v672, %v668
    %v674 = vmul.f32 1.0, %v673
    %v675 = vrcp.pop %v659
    %v676 = vmul.f32 %v659, %v675
    %v677 = vsub.f32 1.0, %v676
    %v678 = vmul.f32 %v675, %v677
    %v679 = vadd.f32 %v675, %v678
    %vm680 = vweird.f32 %v659
    %vm681 = vweird.f32 %v675
    %vm682 = vmor %vm680, %vm681
    %v683 = vsel %vm682, %v675, %v679
    %v684 = vand.u32 2147483647, %v659
    %vm685 = vcmp.eq.f32.partialorder %v684, 8.507059e+37
    %v686 = vand.u32 %v659, 2147483648
    %v687 = vor.u32 1.1754944e-38, %v686
    %v688 = vsel %vm685, %v687, %v683
    %v689 = vmul.f32 1.0, %v688
    %v692 = vrot.slane %v476, 7
    %v693 = vrot.slane %v477, 7
    %v696 = vmul.f32 %v634, %v692
    %v697 = vmul.f32 %v649, %v693
    %v698 = vmul.f32 %v596, %v650
    %v699 = vmul.f32 %v611, %v651
    %v700 = vadd.f32 %v696, %v698
    %v701 = vadd.f32 %v697, %v699
    %v702 = vtanh.pop %v700
    %v703 = vtanh.pop %v701
    %v704 = vmul.f32 %v674, %v702
    %v705 = vmul.f32 %v689, %v703
    %vm706 = vcmask 517121
    %707 = vst.msk [vmem:[#allocation2] sm:$0x2] %vm706, %v704
    %708 = vst.msk [vmem:[#allocation2 + $0x8] sm:$0x2] %vm706, %v705
    %v709 = vpack.c.bf16 %v704, %v704
    %v710 = vpack.c.bf16 %v705, %v705
    %v713 = vunpack.c.l.b16 %v709
    %v714 = vunpack.c.l.b16 %v710
    %v715 = vrot.slane %v713, 1
    %v716 = vsel %vm492, %v714, %v715
    %v717 = vpack.c.b16 %v716, %v716
    %v719 = vsel %vm204, %v717, 0
    %721 = vmatpush.bf16.msra.mxu0 0
    %722 = vmatpush.bf16.msra.mxu0 0
    %723 = vmatpush.bf16.msra.mxu0 0
    %724 = vmatpush.bf16.msra.mxu0 0
    %725 = vmatpush.bf16.msra.mxu0 %v199
    %726 = vmatpush.bf16.msra.mxu0 %v198
    %727 = vmatpush.bf16.msra.mxu0 %v197
    %728 = vmatpush.bf16.msra.mxu0 %v196
    %729 = vmatmul.bf16.gmra.mxu0 %v719
    %v730 = vpop.f32.mrf.mxu0
    %v731 = vadd.f32 0.0, %v730
    %v732 = vpop.f32.mrf.mxu0
    %733 = vdwg.mxu0
    %v735 = vrot.slane %v731, 6
    %v736 = vrot.slane %v731, 7
    %v739 = vadd.f32 %v69, %v735
    %v740 = vadd.f32 %v71, %v736
    %741 = vmatpush.bf16.msra.mxu0 0
    %742 = vmatpush.bf16.msra.mxu0 0
    %743 = vmatpush.bf16.msra.mxu0 0
    %744 = vmatpush.bf16.msra.mxu0 0
    %745 = vmatpush.bf16.msra.mxu0 %v246
    %746 = vmatpush.bf16.msra.mxu0 %v245
    %747 = vmatpush.bf16.msra.mxu0 %v244
    %748 = vmatpush.bf16.msra.mxu0 %v243
    %749 = vmatmul.bf16.gmra.mxu0 %v719
    %v750 = vpop.f32.mrf.mxu0
    %v751 = vadd.f32 0.0, %v750
    %v752 = vpop.f32.mrf.mxu0
    %753 = vdwg.mxu0
    %v755 = vrot.slane %v751, 6
    %v756 = vrot.slane %v751, 7
    %v759 = vadd.f32 %v93, %v755
    %v760 = vadd.f32 %v95, %v756
    %761 = vmatpush.bf16.msra.mxu0 0
    %762 = vmatpush.bf16.msra.mxu0 0
    %763 = vmatpush.bf16.msra.mxu0 0
    %764 = vmatpush.bf16.msra.mxu0 0
    %765 = vmatpush.bf16.msra.mxu0 %v289
    %766 = vmatpush.bf16.msra.mxu0 %v288
    %767 = vmatpush.bf16.msra.mxu0 %v287
    %768 = vmatpush.bf16.msra.mxu0 %v286
    %769 = vmatmul.bf16.gmra.mxu0 %v719
    %v770 = vpop.f32.mrf.mxu0
    %v771 = vadd.f32 0.0, %v770
    %v772 = vpop.f32.mrf.mxu0
    %773 = vdwg.mxu0
    %v775 = vrot.slane %v771, 6
    %v776 = vrot.slane %v771, 7
    %v779 = vadd.f32 %v117, %v775
    %v780 = vadd.f32 %v119, %v776
    %781 = vmatpush.bf16.msra.mxu0 0
    %782 = vmatpush.bf16.msra.mxu0 0
    %783 = vmatpush.bf16.msra.mxu0 0
    %784 = vmatpush.bf16.msra.mxu0 0
    %785 = vmatpush.bf16.msra.mxu0 %v332
    %786 = vmatpush.bf16.msra.mxu0 %v331
    %787 = vmatpush.bf16.msra.mxu0 %v330
    %788 = vmatpush.bf16.msra.mxu0 %v329
    %789 = vmatmul.bf16.gmra.mxu0 %v719
    %v790 = vpop.f32.mrf.mxu0
    %v791 = vadd.f32 0.0, %v790
    %v792 = vpop.f32.mrf.mxu0
    %793 = vdwg.mxu0
    %v795 = vrot.slane %v791, 6
    %v796 = vrot.slane %v791, 7
    %v799 = vadd.f32 %v141, %v795
    %v800 = vadd.f32 %v143, %v796
    %v801 = vxor.u32 %v739, 2147483648
    %v802 = vxor.u32 %v740, 2147483648
    %v803 = vmul.f32 %v801, 1.442695
    %v804 = vpow.pop %v803
    %v805 = vmul.f32 %v802, 1.442695
    %v806 = vpow.pop %v805
    %v807 = vadd.f32 %v804, 1.0
    %v808 = vadd.f32 %v806, 1.0
    %v809 = vrcp.pop %v807
    %v810 = vmul.f32 %v807, %v809
    %v811 = vsub.f32 1.0, %v810
    %v812 = vmul.f32 %v809, %v811
    %v813 = vadd.f32 %v809, %v812
    %vm814 = vweird.f32 %v807
    %vm815 = vweird.f32 %v809
    %vm816 = vmor %vm814, %vm815
    %v817 = vsel %vm816, %v809, %v813
    %v818 = vand.u32 2147483647, %v807
    %vm819 = vcmp.eq.f32.partialorder %v818, 8.507059e+37
    %v820 = vand.u32 %v807, 2147483648
    %v821 = vor.u32 1.1754944e-38, %v820
    %v822 = vsel %vm819, %v821, %v817
    %v823 = vmul.f32 1.0, %v822
    %v824 = vrcp.pop %v808
    %v825 = vmul.f32 %v808, %v824
    %v826 = vsub.f32 1.0, %v825
    %v827 = vmul.f32 %v824, %v826
    %v828 = vadd.f32 %v824, %v827
    %vm829 = vweird.f32 %v808
    %vm830 = vweird.f32 %v824
    %vm831 = vmor %vm829, %vm830
    %v832 = vsel %vm831, %v824, %v828
    %v833 = vand.u32 2147483647, %v808
    %vm834 = vcmp.eq.f32.partialorder %v833, 8.507059e+37
    %v835 = vand.u32 %v808, 2147483648
    %v836 = vor.u32 1.1754944e-38, %v835
    %v837 = vsel %vm834, %v836, %v832
    %v838 = vmul.f32 1.0, %v837
    %v839 = vxor.u32 %v759, 2147483648
    %v840 = vxor.u32 %v760, 2147483648
    %v841 = vmul.f32 %v839, 1.442695
    %v842 = vpow.pop %v841
    %v843 = vmul.f32 %v840, 1.442695
    %v844 = vpow.pop %v843
    %v845 = vadd.f32 %v842, 1.0
    %v846 = vadd.f32 %v844, 1.0
    %v847 = vrcp.pop %v845
    %v848 = vmul.f32 %v845, %v847
    %v849 = vsub.f32 1.0, %v848
    %v850 = vmul.f32 %v847, %v849
    %v851 = vadd.f32 %v847, %v850
    %vm852 = vweird.f32 %v845
    %vm853 = vweird.f32 %v847
    %vm854 = vmor %vm852, %vm853
    %v855 = vsel %vm854, %v847, %v851
    %v856 = vand.u32 2147483647, %v845
    %vm857 = vcmp.eq.f32.partialorder %v856, 8.507059e+37
    %v858 = vand.u32 %v845, 2147483648
    %v859 = vor.u32 1.1754944e-38, %v858
    %v860 = vsel %vm857, %v859, %v855
    %v861 = vmul.f32 1.0, %v860
    %v862 = vrcp.pop %v846
    %v863 = vmul.f32 %v846, %v862
    %v864 = vsub.f32 1.0, %v863
    %v865 = vmul.f32 %v862, %v864
    %v866 = vadd.f32 %v862, %v865
    %vm867 = vweird.f32 %v846
    %vm868 = vweird.f32 %v862
    %vm869 = vmor %vm867, %vm868
    %v870 = vsel %vm869, %v862, %v866
    %v871 = vand.u32 2147483647, %v846
    %vm872 = vcmp.eq.f32.partialorder %v871, 8.507059e+37
    %v873 = vand.u32 %v846, 2147483648
    %v874 = vor.u32 1.1754944e-38, %v873
    %v875 = vsel %vm872, %v874, %v870
    %v876 = vmul.f32 1.0, %v875
    %v877 = vtanh.pop %v779
    %v878 = vtanh.pop %v780
    %v879 = vxor.u32 %v799, 2147483648
    %v880 = vxor.u32 %v800, 2147483648
    %v881 = vmul.f32 %v879, 1.442695
    %v882 = vpow.pop %v881
    %v883 = vmul.f32 %v880, 1.442695
    %v884 = vpow.pop %v883
    %v885 = vadd.f32 %v882, 1.0
    %v886 = vadd.f32 %v884, 1.0
    %v887 = vrcp.pop %v885
    %v888 = vmul.f32 %v885, %v887
    %v889 = vsub.f32 1.0, %v888
    %v890 = vmul.f32 %v887, %v889
    %v891 = vadd.f32 %v887, %v890
    %vm892 = vweird.f32 %v885
    %vm893 = vweird.f32 %v887
    %vm894 = vmor %vm892, %vm893
    %v895 = vsel %vm894, %v887, %v891
    %v896 = vand.u32 2147483647, %v885
    %vm897 = vcmp.eq.f32.partialorder %v896, 8.507059e+37
    %v898 = vand.u32 %v885, 2147483648
    %v899 = vor.u32 1.1754944e-38, %v898
    %v900 = vsel %vm897, %v899, %v895
    %v901 = vmul.f32 1.0, %v900
    %v902 = vrcp.pop %v886
    %v903 = vmul.f32 %v886, %v902
    %v904 = vsub.f32 1.0, %v903
    %v905 = vmul.f32 %v902, %v904
    %v906 = vadd.f32 %v902, %v905
    %vm907 = vweird.f32 %v886
    %vm908 = vweird.f32 %v902
    %vm909 = vmor %vm907, %vm908
    %v910 = vsel %vm909, %v902, %v906
    %v911 = vand.u32 2147483647, %v886
    %vm912 = vcmp.eq.f32.partialorder %v911, 8.507059e+37
    %v913 = vand.u32 %v886, 2147483648
    %v914 = vor.u32 1.1754944e-38, %v913
    %v915 = vsel %vm912, %v914, %v910
    %v916 = vmul.f32 1.0, %v915
    %v919 = vrot.slane %v700, 7
    %v920 = vrot.slane %v701, 7
    %v923 = vmul.f32 %v861, %v919
    %v924 = vmul.f32 %v876, %v920
    %v925 = vmul.f32 %v823, %v877
    %v926 = vmul.f32 %v838, %v878
    %v927 = vadd.f32 %v923, %v925
    %v928 = vadd.f32 %v924, %v926
    %v929 = vtanh.pop %v927
    %v930 = vtanh.pop %v928
    %v931 = vmul.f32 %v901, %v929
    %v932 = vmul.f32 %v916, %v930
    %vm933 = vcmask 518146
    %934 = vst.msk [vmem:[#allocation2] sm:$0x4] %vm933, %v931
    %935 = vst.msk [vmem:[#allocation2 + $0x8] sm:$0x4] %vm933, %v932
    %v936 = vpack.c.bf16 %v931, %v931
    %v937 = vpack.c.bf16 %v932, %v932
    %v940 = vunpack.c.l.b16 %v936
    %v941 = vunpack.c.l.b16 %v937
    %v942 = vrot.slane %v940, 2
    %v943 = vrot.slane %v941, 1
    %v944 = vsel %vm492, %v943, %v942
    %v945 = vpack.c.b16 %v944, %v944
    %v947 = vsel %vm204, %v945, 0
    %949 = vmatpush.bf16.msra.mxu0 0
    %950 = vmatpush.bf16.msra.mxu0 0
    %951 = vmatpush.bf16.msra.mxu0 0
    %952 = vmatpush.bf16.msra.mxu0 0
    %953 = vmatpush.bf16.msra.mxu0 %v199
    %954 = vmatpush.bf16.msra.mxu0 %v198
    %955 = vmatpush.bf16.msra.mxu0 %v197
    %956 = vmatpush.bf16.msra.mxu0 %v196
    %957 = vmatmul.bf16.gmra.mxu0 %v947
    %v958 = vpop.f32.mrf.mxu0
    %v959 = vadd.f32 0.0, %v958
    %v960 = vpop.f32.mrf.mxu0
    %961 = vdwg.mxu0
    %v963 = vrot.slane %v959, 5
    %v964 = vrot.slane %v959, 6
    %v967 = vadd.f32 %v69, %v963
    %v968 = vadd.f32 %v71, %v964
    %969 = vmatpush.bf16.msra.mxu0 0
    %970 = vmatpush.bf16.msra.mxu0 0
    %971 = vmatpush.bf16.msra.mxu0 0
    %972 = vmatpush.bf16.msra.mxu0 0
    %973 = vmatpush.bf16.msra.mxu0 %v246
    %974 = vmatpush.bf16.msra.mxu0 %v245
    %975 = vmatpush.bf16.msra.mxu0 %v244
    %976 = vmatpush.bf16.msra.mxu0 %v243
    %977 = vmatmul.bf16.gmra.mxu0 %v947
    %v978 = vpop.f32.mrf.mxu0
    %v979 = vadd.f32 0.0, %v978
    %v980 = vpop.f32.mrf.mxu0
    %981 = vdwg.mxu0
    %v983 = vrot.slane %v979, 5
    %v984 = vrot.slane %v979, 6
    %v987 = vadd.f32 %v93, %v983
    %v988 = vadd.f32 %v95, %v984
    %989 = vmatpush.bf16.msra.mxu0 0
    %990 = vmatpush.bf16.msra.mxu0 0
    %991 = vmatpush.bf16.msra.mxu0 0
    %992 = vmatpush.bf16.msra.mxu0 0
    %993 = vmatpush.bf16.msra.mxu0 %v289
    %994 = vmatpush.bf16.msra.mxu0 %v288
    %995 = vmatpush.bf16.msra.mxu0 %v287
    %996 = vmatpush.bf16.msra.mxu0 %v286
    %997 = vmatmul.bf16.gmra.mxu0 %v947
    %v998 = vpop.f32.mrf.mxu0
    %v999 = vadd.f32 0.0, %v998
    %v1000 = vpop.f32.mrf.mxu0
    %1001 = vdwg.mxu0
    %v1003 = vrot.slane %v999, 5
    %v1004 = vrot.slane %v999, 6
    %v1007 = vadd.f32 %v117, %v1003
    %v1008 = vadd.f32 %v119, %v1004
    %1009 = vmatpush.bf16.msra.mxu0 0
    %1010 = vmatpush.bf16.msra.mxu0 0
    %1011 = vmatpush.bf16.msra.mxu0 0
    %1012 = vmatpush.bf16.msra.mxu0 0
    %1013 = vmatpush.bf16.msra.mxu0 %v332
    %1014 = vmatpush.bf16.msra.mxu0 %v331
    %1015 = vmatpush.bf16.msra.mxu0 %v330
    %1016 = vmatpush.bf16.msra.mxu0 %v329
    %1017 = vmatmul.bf16.gmra.mxu0 %v947
    %v1018 = vpop.f32.mrf.mxu0
    %v1019 = vadd.f32 0.0, %v1018
    %v1020 = vpop.f32.mrf.mxu0
    %1021 = vdwg.mxu0
    %v1023 = vrot.slane %v1019, 5
    %v1024 = vrot.slane %v1019, 6
    %v1027 = vadd.f32 %v141, %v1023
    %v1028 = vadd.f32 %v143, %v1024
    %v1029 = vxor.u32 %v967, 2147483648
    %v1030 = vxor.u32 %v968, 2147483648
    %v1031 = vmul.f32 %v1029, 1.442695
    %v1032 = vpow.pop %v1031
    %v1033 = vmul.f32 %v1030, 1.442695
    %v1034 = vpow.pop %v1033
    %v1035 = vadd.f32 %v1032, 1.0
    %v1036 = vadd.f32 %v1034, 1.0
    %v1037 = vrcp.pop %v1035
    %v1038 = vmul.f32 %v1035, %v1037
    %v1039 = vsub.f32 1.0, %v1038
    %v1040 = vmul.f32 %v1037, %v1039
    %v1041 = vadd.f32 %v1037, %v1040
    %vm1042 = vweird.f32 %v1035
    %vm1043 = vweird.f32 %v1037
    %vm1044 = vmor %vm1042, %vm1043
    %v1045 = vsel %vm1044, %v1037, %v1041
    %v1046 = vand.u32 2147483647, %v1035
    %vm1047 = vcmp.eq.f32.partialorder %v1046, 8.507059e+37
    %v1048 = vand.u32 %v1035, 2147483648
    %v1049 = vor.u32 1.1754944e-38, %v1048
    %v1050 = vsel %vm1047, %v1049, %v1045
    %v1051 = vmul.f32 1.0, %v1050
    %v1052 = vrcp.pop %v1036
    %v1053 = vmul.f32 %v1036, %v1052
    %v1054 = vsub.f32 1.0, %v1053
    %v1055 = vmul.f32 %v1052, %v1054
    %v1056 = vadd.f32 %v1052, %v1055
    %vm1057 = vweird.f32 %v1036
    %vm1058 = vweird.f32 %v1052
    %vm1059 = vmor %vm1057, %vm1058
    %v1060 = vsel %vm1059, %v1052, %v1056
    %v1061 = vand.u32 2147483647, %v1036
    %vm1062 = vcmp.eq.f32.partialorder %v1061, 8.507059e+37
    %v1063 = vand.u32 %v1036, 2147483648
    %v1064 = vor.u32 1.1754944e-38, %v1063
    %v1065 = vsel %vm1062, %v1064, %v1060
    %v1066 = vmul.f32 1.0, %v1065
    %v1067 = vxor.u32 %v987, 2147483648
    %v1068 = vxor.u32 %v988, 2147483648
    %v1069 = vmul.f32 %v1067, 1.442695
    %v1070 = vpow.pop %v1069
    %v1071 = vmul.f32 %v1068, 1.442695
    %v1072 = vpow.pop %v1071
    %v1073 = vadd.f32 %v1070, 1.0
    %v1074 = vadd.f32 %v1072, 1.0
    %v1075 = vrcp.pop %v1073
    %v1076 = vmul.f32 %v1073, %v1075
    %v1077 = vsub.f32 1.0, %v1076
    %v1078 = vmul.f32 %v1075, %v1077
    %v1079 = vadd.f32 %v1075, %v1078
    %vm1080 = vweird.f32 %v1073
    %vm1081 = vweird.f32 %v1075
    %vm1082 = vmor %vm1080, %vm1081
    %v1083 = vsel %vm1082, %v1075, %v1079
    %v1084 = vand.u32 2147483647, %v1073
    %vm1085 = vcmp.eq.f32.partialorder %v1084, 8.507059e+37
    %v1086 = vand.u32 %v1073, 2147483648
    %v1087 = vor.u32 1.1754944e-38, %v1086
    %v1088 = vsel %vm1085, %v1087, %v1083
    %v1089 = vmul.f32 1.0, %v1088
    %v1090 = vrcp.pop %v1074
    %v1091 = vmul.f32 %v1074, %v1090
    %v1092 = vsub.f32 1.0, %v1091
    %v1093 = vmul.f32 %v1090, %v1092
    %v1094 = vadd.f32 %v1090, %v1093
    %vm1095 = vweird.f32 %v1074
    %vm1096 = vweird.f32 %v1090
    %vm1097 = vmor %vm1095, %vm1096
    %v1098 = vsel %vm1097, %v1090, %v1094
    %v1099 = vand.u32 2147483647, %v1074
    %vm1100 = vcmp.eq.f32.partialorder %v1099, 8.507059e+37
    %v1101 = vand.u32 %v1074, 2147483648
    %v1102 = vor.u32 1.1754944e-38, %v1101
    %v1103 = vsel %vm1100, %v1102, %v1098
    %v1104 = vmul.f32 1.0, %v1103
    %v1105 = vtanh.pop %v1007
    %v1106 = vtanh.pop %v1008
    %v1107 = vxor.u32 %v1027, 2147483648
    %v1108 = vxor.u32 %v1028, 2147483648
    %v1109 = vmul.f32 %v1107, 1.442695
    %v1110 = vpow.pop %v1109
    %v1111 = vmul.f32 %v1108, 1.442695
    %v1112 = vpow.pop %v1111
    %v1113 = vadd.f32 %v1110, 1.0
    %v1114 = vadd.f32 %v1112, 1.0
    %v1115 = vrcp.pop %v1113
    %v1116 = vmul.f32 %v1113, %v1115
    %v1117 = vsub.f32 1.0, %v1116
    %v1118 = vmul.f32 %v1115, %v1117
    %v1119 = vadd.f32 %v1115, %v1118
    %vm1120 = vweird.f32 %v1113
    %vm1121 = vweird.f32 %v1115
    %vm1122 = vmor %vm1120, %vm1121
    %v1123 = vsel %vm1122, %v1115, %v1119
    %v1124 = vand.u32 2147483647, %v1113
    %vm1125 = vcmp.eq.f32.partialorder %v1124, 8.507059e+37
    %v1126 = vand.u32 %v1113, 2147483648
    %v1127 = vor.u32 1.1754944e-38, %v1126
    %v1128 = vsel %vm1125, %v1127, %v1123
    %v1129 = vmul.f32 1.0, %v1128
    %v1130 = vrcp.pop %v1114
    %v1131 = vmul.f32 %v1114, %v1130
    %v1132 = vsub.f32 1.0, %v1131
    %v1133 = vmul.f32 %v1130, %v1132
    %v1134 = vadd.f32 %v1130, %v1133
    %vm1135 = vweird.f32 %v1114
    %vm1136 = vweird.f32 %v1130
    %vm1137 = vmor %vm1135, %vm1136
    %v1138 = vsel %vm1137, %v1130, %v1134
    %v1139 = vand.u32 2147483647, %v1114
    %vm1140 = vcmp.eq.f32.partialorder %v1139, 8.507059e+37
    %v1141 = vand.u32 %v1114, 2147483648
    %v1142 = vor.u32 1.1754944e-38, %v1141
    %v1143 = vsel %vm1140, %v1142, %v1138
    %v1144 = vmul.f32 1.0, %v1143
    %v1147 = vrot.slane %v927, 7
    %v1148 = vrot.slane %v928, 7
    %v1151 = vmul.f32 %v1089, %v1147
    %v1152 = vmul.f32 %v1104, %v1148
    %v1153 = vmul.f32 %v1051, %v1105
    %v1154 = vmul.f32 %v1066, %v1106
    %v1155 = vadd.f32 %v1151, %v1153
    %v1156 = vadd.f32 %v1152, %v1154
    %v1157 = vtanh.pop %v1155
    %v1158 = vtanh.pop %v1156
    %v1159 = vmul.f32 %v1129, %v1157
    %v1160 = vmul.f32 %v1144, %v1158
    %vm1161 = vcmask 519171
    %1162 = vst.msk [vmem:[#allocation2] sm:$0x8] %vm1161, %v1159
    %1163 = vst.msk [vmem:[#allocation2 + $0x8] sm:$0x8] %vm1161, %v1160
    %v1164 = vpack.c.bf16 %v1159, %v1159
    %v1165 = vpack.c.bf16 %v1160, %v1160
    %v1168 = vunpack.c.l.b16 %v1164
    %v1169 = vunpack.c.l.b16 %v1165
    %v1170 = vrot.slane %v1168, 3
    %v1171 = vrot.slane %v1169, 2
    %v1172 = vsel %vm492, %v1171, %v1170
    %v1173 = vpack.c.b16 %v1172, %v1172
    %v1175 = vsel %vm204, %v1173, 0
    %1177 = vmatpush.bf16.msra.mxu0 0
    %1178 = vmatpush.bf16.msra.mxu0 0
    %1179 = vmatpush.bf16.msra.mxu0 0
    %1180 = vmatpush.bf16.msra.mxu0 0
    %1181 = vmatpush.bf16.msra.mxu0 %v199
    %1182 = vmatpush.bf16.msra.mxu0 %v198
    %1183 = vmatpush.bf16.msra.mxu0 %v197
    %1184 = vmatpush.bf16.msra.mxu0 %v196
    %1185 = vmatmul.bf16.gmra.mxu0 %v1175
    %v1186 = vpop.f32.mrf.mxu0
    %v1187 = vadd.f32 0.0, %v1186
    %v1188 = vpop.f32.mrf.mxu0
    %1189 = vdwg.mxu0
    %v1191 = vrot.slane %v1187, 4
    %v1192 = vrot.slane %v1187, 5
    %v1195 = vadd.f32 %v69, %v1191
    %v1196 = vadd.f32 %v71, %v1192
    %1197 = vmatpush.bf16.msra.mxu0 0
    %1198 = vmatpush.bf16.msra.mxu0 0
    %1199 = vmatpush.bf16.msra.mxu0 0
    %1200 = vmatpush.bf16.msra.mxu0 0
    %1201 = vmatpush.bf16.msra.mxu0 %v246
    %1202 = vmatpush.bf16.msra.mxu0 %v245
    %1203 = vmatpush.bf16.msra.mxu0 %v244
    %1204 = vmatpush.bf16.msra.mxu0 %v243
    %1205 = vmatmul.bf16.gmra.mxu0 %v1175
    %v1206 = vpop.f32.mrf.mxu0
    %v1207 = vadd.f32 0.0, %v1206
    %v1208 = vpop.f32.mrf.mxu0
    %1209 = vdwg.mxu0
    %v1211 = vrot.slane %v1207, 4
    %v1212 = vrot.slane %v1207, 5
    %v1215 = vadd.f32 %v93, %v1211
    %v1216 = vadd.f32 %v95, %v1212
    %1217 = vmatpush.bf16.msra.mxu0 0
    %1218 = vmatpush.bf16.msra.mxu0 0
    %1219 = vmatpush.bf16.msra.mxu0 0
    %1220 = vmatpush.bf16.msra.mxu0 0
    %1221 = vmatpush.bf16.msra.mxu0 %v289
    %1222 = vmatpush.bf16.msra.mxu0 %v288
    %1223 = vmatpush.bf16.msra.mxu0 %v287
    %1224 = vmatpush.bf16.msra.mxu0 %v286
    %1225 = vmatmul.bf16.gmra.mxu0 %v1175
    %v1226 = vpop.f32.mrf.mxu0
    %v1227 = vadd.f32 0.0, %v1226
    %v1228 = vpop.f32.mrf.mxu0
    %1229 = vdwg.mxu0
    %v1231 = vrot.slane %v1227, 4
    %v1232 = vrot.slane %v1227, 5
    %v1235 = vadd.f32 %v117, %v1231
    %v1236 = vadd.f32 %v119, %v1232
    %1237 = vmatpush.bf16.msra.mxu0 0
    %1238 = vmatpush.bf16.msra.mxu0 0
    %1239 = vmatpush.bf16.msra.mxu0 0
    %1240 = vmatpush.bf16.msra.mxu0 0
    %1241 = vmatpush.bf16.msra.mxu0 %v332
    %1242 = vmatpush.bf16.msra.mxu0 %v331
    %1243 = vmatpush.bf16.msra.mxu0 %v330
    %1244 = vmatpush.bf16.msra.mxu0 %v329
    %1245 = vmatmul.bf16.gmra.mxu0 %v1175
    %v1246 = vpop.f32.mrf.mxu0
    %v1247 = vadd.f32 0.0, %v1246
    %v1248 = vpop.f32.mrf.mxu0
    %1249 = vdwg.mxu0
    %v1251 = vrot.slane %v1247, 4
    %v1252 = vrot.slane %v1247, 5
    %v1255 = vadd.f32 %v141, %v1251
    %v1256 = vadd.f32 %v143, %v1252
    %v1257 = vxor.u32 %v1195, 2147483648
    %v1258 = vxor.u32 %v1196, 2147483648
    %v1259 = vmul.f32 %v1257, 1.442695
    %v1260 = vpow.pop %v1259
    %v1261 = vmul.f32 %v1258, 1.442695
    %v1262 = vpow.pop %v1261
    %v1263 = vadd.f32 %v1260, 1.0
    %v1264 = vadd.f32 %v1262, 1.0
    %v1265 = vrcp.pop %v1263
    %v1266 = vmul.f32 %v1263, %v1265
    %v1267 = vsub.f32 1.0, %v1266
    %v1268 = vmul.f32 %v1265, %v1267
    %v1269 = vadd.f32 %v1265, %v1268
    %vm1270 = vweird.f32 %v1263
    %vm1271 = vweird.f32 %v1265
    %vm1272 = vmor %vm1270, %vm1271
    %v1273 = vsel %vm1272, %v1265, %v1269
    %v1274 = vand.u32 2147483647, %v1263
    %vm1275 = vcmp.eq.f32.partialorder %v1274, 8.507059e+37
    %v1276 = vand.u32 %v1263, 2147483648
    %v1277 = vor.u32 1.1754944e-38, %v1276
    %v1278 = vsel %vm1275, %v1277, %v1273
    %v1279 = vmul.f32 1.0, %v1278
    %v1280 = vrcp.pop %v1264
    %v1281 = vmul.f32 %v1264, %v1280
    %v1282 = vsub.f32 1.0, %v1281
    %v1283 = vmul.f32 %v1280, %v1282
    %v1284 = vadd.f32 %v1280, %v1283
    %vm1285 = vweird.f32 %v1264
    %vm1286 = vweird.f32 %v1280
    %vm1287 = vmor %vm1285, %vm1286
    %v1288 = vsel %vm1287, %v1280, %v1284
    %v1289 = vand.u32 2147483647, %v1264
    %vm1290 = vcmp.eq.f32.partialorder %v1289, 8.507059e+37
    %v1291 = vand.u32 %v1264, 2147483648
    %v1292 = vor.u32 1.1754944e-38, %v1291
    %v1293 = vsel %vm1290, %v1292, %v1288
    %v1294 = vmul.f32 1.0, %v1293
    %v1295 = vxor.u32 %v1215, 2147483648
    %v1296 = vxor.u32 %v1216, 2147483648
    %v1297 = vmul.f32 %v1295, 1.442695
    %v1298 = vpow.pop %v1297
    %v1299 = vmul.f32 %v1296, 1.442695
    %v1300 = vpow.pop %v1299
    %v1301 = vadd.f32 %v1298, 1.0
    %v1302 = vadd.f32 %v1300, 1.0
    %v1303 = vrcp.pop %v1301
    %v1304 = vmul.f32 %v1301, %v1303
    %v1305 = vsub.f32 1.0, %v1304
    %v1306 = vmul.f32 %v1303, %v1305
    %v1307 = vadd.f32 %v1303, %v1306
    %vm1308 = vweird.f32 %v1301
    %vm1309 = vweird.f32 %v1303
    %vm1310 = vmor %vm1308, %vm1309
    %v1311 = vsel %vm1310, %v1303, %v1307
    %v1312 = vand.u32 2147483647, %v1301
    %vm1313 = vcmp.eq.f32.partialorder %v1312, 8.507059e+37
    %v1314 = vand.u32 %v1301, 2147483648
    %v1315 = vor.u32 1.1754944e-38, %v1314
    %v1316 = vsel %vm1313, %v1315, %v1311
    %v1317 = vmul.f32 1.0, %v1316
    %v1318 = vrcp.pop %v1302
    %v1319 = vmul.f32 %v1302, %v1318
    %v1320 = vsub.f32 1.0, %v1319
    %v1321 = vmul.f32 %v1318, %v1320
    %v1322 = vadd.f32 %v1318, %v1321
    %vm1323 = vweird.f32 %v1302
    %vm1324 = vweird.f32 %v1318
    %vm1325 = vmor %vm1323, %vm1324
    %v1326 = vsel %vm1325, %v1318, %v1322
    %v1327 = vand.u32 2147483647, %v1302
    %vm1328 = vcmp.eq.f32.partialorder %v1327, 8.507059e+37
    %v1329 = vand.u32 %v1302, 2147483648
    %v1330 = vor.u32 1.1754944e-38, %v1329
    %v1331 = vsel %vm1328, %v1330, %v1326
    %v1332 = vmul.f32 1.0, %v1331
    %v1333 = vtanh.pop %v1235
    %v1334 = vtanh.pop %v1236
    %v1335 = vxor.u32 %v1255, 2147483648
    %v1336 = vxor.u32 %v1256, 2147483648
    %v1337 = vmul.f32 %v1335, 1.442695
    %v1338 = vpow.pop %v1337
    %v1339 = vmul.f32 %v1336, 1.442695
    %v1340 = vpow.pop %v1339
    %v1341 = vadd.f32 %v1338, 1.0
    %v1342 = vadd.f32 %v1340, 1.0
    %v1343 = vrcp.pop %v1341
    %v1344 = vmul.f32 %v1341, %v1343
    %v1345 = vsub.f32 1.0, %v1344
    %v1346 = vmul.f32 %v1343, %v1345
    %v1347 = vadd.f32 %v1343, %v1346
    %vm1348 = vweird.f32 %v1341
    %vm1349 = vweird.f32 %v1343
    %vm1350 = vmor %vm1348, %vm1349
    %v1351 = vsel %vm1350, %v1343, %v1347
    %v1352 = vand.u32 2147483647, %v1341
    %vm1353 = vcmp.eq.f32.partialorder %v1352, 8.507059e+37
    %v1354 = vand.u32 %v1341, 2147483648
    %v1355 = vor.u32 1.1754944e-38, %v1354
    %v1356 = vsel %vm1353, %v1355, %v1351
    %v1357 = vmul.f32 1.0, %v1356
    %v1358 = vrcp.pop %v1342
    %v1359 = vmul.f32 %v1342, %v1358
    %v1360 = vsub.f32 1.0, %v1359
    %v1361 = vmul.f32 %v1358, %v1360
    %v1362 = vadd.f32 %v1358, %v1361
    %vm1363 = vweird.f32 %v1342
    %vm1364 = vweird.f32 %v1358
    %vm1365 = vmor %vm1363, %vm1364
    %v1366 = vsel %vm1365, %v1358, %v1362
    %v1367 = vand.u32 2147483647, %v1342
    %vm1368 = vcmp.eq.f32.partialorder %v1367, 8.507059e+37
    %v1369 = vand.u32 %v1342, 2147483648
    %v1370 = vor.u32 1.1754944e-38, %v1369
    %v1371 = vsel %vm1368, %v1370, %v1366
    %v1372 = vmul.f32 1.0, %v1371
    %v1375 = vrot.slane %v1155, 7
    %v1376 = vrot.slane %v1156, 7
    %v1379 = vmul.f32 %v1317, %v1375
    %v1380 = vmul.f32 %v1332, %v1376
    %v1381 = vmul.f32 %v1279, %v1333
    %v1382 = vmul.f32 %v1294, %v1334
    %v1383 = vadd.f32 %v1379, %v1381
    %v1384 = vadd.f32 %v1380, %v1382
    %v1385 = vtanh.pop %v1383
    %v1386 = vtanh.pop %v1384
    %v1387 = vmul.f32 %v1357, %v1385
    %v1388 = vmul.f32 %v1372, %v1386
    %vm1389 = vcmask 520196
    %1390 = vst.msk [vmem:[#allocation2] sm:$0x10] %vm1389, %v1387
    %1391 = vst.msk [vmem:[#allocation2 + $0x8] sm:$0x10] %vm1389, %v1388
    %v1392 = vpack.c.bf16 %v1387, %v1387
    %v1393 = vpack.c.bf16 %v1388, %v1388
    %v1396 = vunpack.c.l.b16 %v1392
    %v1397 = vunpack.c.l.b16 %v1393
    %v1398 = vrot.slane %v1396, 4
    %v1399 = vrot.slane %v1397, 3
    %v1400 = vsel %vm492, %v1399, %v1398
    %v1401 = vpack.c.b16 %v1400, %v1400
    %v1403 = vsel %vm204, %v1401, 0
    %1405 = vmatpush.bf16.msra.mxu0 0
    %1406 = vmatpush.bf16.msra.mxu0 0
    %1407 = vmatpush.bf16.msra.mxu0 0
    %1408 = vmatpush.bf16.msra.mxu0 0
    %1409 = vmatpush.bf16.msra.mxu0 %v199
    %1410 = vmatpush.bf16.msra.mxu0 %v198
    %1411 = vmatpush.bf16.msra.mxu0 %v197
    %1412 = vmatpush.bf16.msra.mxu0 %v196
    %1413 = vmatmul.bf16.gmra.mxu0 %v1403
    %v1414 = vpop.f32.mrf.mxu0
    %v1415 = vadd.f32 0.0, %v1414
    %v1416 = vpop.f32.mrf.mxu0
    %1417 = vdwg.mxu0
    %v1419 = vrot.slane %v1415, 3
    %v1420 = vrot.slane %v1415, 4
    %v1423 = vadd.f32 %v69, %v1419
    %v1424 = vadd.f32 %v71, %v1420
    %1425 = vmatpush.bf16.msra.mxu0 0
    %1426 = vmatpush.bf16.msra.mxu0 0
    %1427 = vmatpush.bf16.msra.mxu0 0
    %1428 = vmatpush.bf16.msra.mxu0 0
    %1429 = vmatpush.bf16.msra.mxu0 %v246
    %1430 = vmatpush.bf16.msra.mxu0 %v245
    %1431 = vmatpush.bf16.msra.mxu0 %v244
    %1432 = vmatpush.bf16.msra.mxu0 %v243
    %1433 = vmatmul.bf16.gmra.mxu0 %v1403
    %v1434 = vpop.f32.mrf.mxu0
    %v1435 = vadd.f32 0.0, %v1434
    %v1436 = vpop.f32.mrf.mxu0
    %1437 = vdwg.mxu0
    %v1439 = vrot.slane %v1435, 3
    %v1440 = vrot.slane %v1435, 4
    %v1443 = vadd.f32 %v93, %v1439
    %v1444 = vadd.f32 %v95, %v1440
    %1445 = vmatpush.bf16.msra.mxu0 0
    %1446 = vmatpush.bf16.msra.mxu0 0
    %1447 = vmatpush.bf16.msra.mxu0 0
    %1448 = vmatpush.bf16.msra.mxu0 0
    %1449 = vmatpush.bf16.msra.mxu0 %v289
    %1450 = vmatpush.bf16.msra.mxu0 %v288
    %1451 = vmatpush.bf16.msra.mxu0 %v287
    %1452 = vmatpush.bf16.msra.mxu0 %v286
    %1453 = vmatmul.bf16.gmra.mxu0 %v1403
    %v1454 = vpop.f32.mrf.mxu0
    %v1455 = vadd.f32 0.0, %v1454
    %v1456 = vpop.f32.mrf.mxu0
    %1457 = vdwg.mxu0
    %v1459 = vrot.slane %v1455, 3
    %v1460 = vrot.slane %v1455, 4
    %v1463 = vadd.f32 %v117, %v1459
    %v1464 = vadd.f32 %v119, %v1460
    %1465 = vmatpush.bf16.msra.mxu0 0
    %1466 = vmatpush.bf16.msra.mxu0 0
    %1467 = vmatpush.bf16.msra.mxu0 0
    %1468 = vmatpush.bf16.msra.mxu0 0
    %1469 = vmatpush.bf16.msra.mxu0 %v332
    %1470 = vmatpush.bf16.msra.mxu0 %v331
    %1471 = vmatpush.bf16.msra.mxu0 %v330
    %1472 = vmatpush.bf16.msra.mxu0 %v329
    %1473 = vmatmul.bf16.gmra.mxu0 %v1403
    %v1474 = vpop.f32.mrf.mxu0
    %v1475 = vadd.f32 0.0, %v1474
    %v1476 = vpop.f32.mrf.mxu0
    %1477 = vdwg.mxu0
    %v1479 = vrot.slane %v1475, 3
    %v1480 = vrot.slane %v1475, 4
    %v1483 = vadd.f32 %v141, %v1479
    %v1484 = vadd.f32 %v143, %v1480
    %v1485 = vxor.u32 %v1423, 2147483648
    %v1486 = vxor.u32 %v1424, 2147483648
    %v1487 = vmul.f32 %v1485, 1.442695
    %v1488 = vpow.pop %v1487
    %v1489 = vmul.f32 %v1486, 1.442695
    %v1490 = vpow.pop %v1489
    %v1491 = vadd.f32 %v1488, 1.0
    %v1492 = vadd.f32 %v1490, 1.0
    %v1493 = vrcp.pop %v1491
    %v1494 = vmul.f32 %v1491, %v1493
    %v1495 = vsub.f32 1.0, %v1494
    %v1496 = vmul.f32 %v1493, %v1495
    %v1497 = vadd.f32 %v1493, %v1496
    %vm1498 = vweird.f32 %v1491
    %vm1499 = vweird.f32 %v1493
    %vm1500 = vmor %vm1498, %vm1499
    %v1501 = vsel %vm1500, %v1493, %v1497
    %v1502 = vand.u32 2147483647, %v1491
    %vm1503 = vcmp.eq.f32.partialorder %v1502, 8.507059e+37
    %v1504 = vand.u32 %v1491, 2147483648
    %v1505 = vor.u32 1.1754944e-38, %v1504
    %v1506 = vsel %vm1503, %v1505, %v1501
    %v1507 = vmul.f32 1.0, %v1506
    %v1508 = vrcp.pop %v1492
    %v1509 = vmul.f32 %v1492, %v1508
    %v1510 = vsub.f32 1.0, %v1509
    %v1511 = vmul.f32 %v1508, %v1510
    %v1512 = vadd.f32 %v1508, %v1511
    %vm1513 = vweird.f32 %v1492
    %vm1514 = vweird.f32 %v1508
    %vm1515 = vmor %vm1513, %vm1514
    %v1516 = vsel %vm1515, %v1508, %v1512
    %v1517 = vand.u32 2147483647, %v1492
    %vm1518 = vcmp.eq.f32.partialorder %v1517, 8.507059e+37
    %v1519 = vand.u32 %v1492, 2147483648
    %v1520 = vor.u32 1.1754944e-38, %v1519
    %v1521 = vsel %vm1518, %v1520, %v1516
    %v1522 = vmul.f32 1.0, %v1521
    %v1523 = vxor.u32 %v1443, 2147483648
    %v1524 = vxor.u32 %v1444, 2147483648
    %v1525 = vmul.f32 %v1523, 1.442695
    %v1526 = vpow.pop %v1525
    %v1527 = vmul.f32 %v1524, 1.442695
    %v1528 = vpow.pop %v1527
    %v1529 = vadd.f32 %v1526, 1.0
    %v1530 = vadd.f32 %v1528, 1.0
    %v1531 = vrcp.pop %v1529
    %v1532 = vmul.f32 %v1529, %v1531
    %v1533 = vsub.f32 1.0, %v1532
    %v1534 = vmul.f32 %v1531, %v1533
    %v1535 = vadd.f32 %v1531, %v1534
    %vm1536 = vweird.f32 %v1529
    %vm1537 = vweird.f32 %v1531
    %vm1538 = vmor %vm1536, %vm1537
    %v1539 = vsel %vm1538, %v1531, %v1535
    %v1540 = vand.u32 2147483647, %v1529
    %vm1541 = vcmp.eq.f32.partialorder %v1540, 8.507059e+37
    %v1542 = vand.u32 %v1529, 2147483648
    %v1543 = vor.u32 1.1754944e-38, %v1542
    %v1544 = vsel %vm1541, %v1543, %v1539
    %v1545 = vmul.f32 1.0, %v1544
    %v1546 = vrcp.pop %v1530
    %v1547 = vmul.f32 %v1530, %v1546
    %v1548 = vsub.f32 1.0, %v1547
    %v1549 = vmul.f32 %v1546, %v1548
    %v1550 = vadd.f32 %v1546, %v1549
    %vm1551 = vweird.f32 %v1530
    %vm1552 = vweird.f32 %v1546
    %vm1553 = vmor %vm1551, %vm1552
    %v1554 = vsel %vm1553, %v1546, %v1550
    %v1555 = vand.u32 2147483647, %v1530
    %vm1556 = vcmp.eq.f32.partialorder %v1555, 8.507059e+37
    %v1557 = vand.u32 %v1530, 2147483648
    %v1558 = vor.u32 1.1754944e-38, %v1557
    %v1559 = vsel %vm1556, %v1558, %v1554
    %v1560 = vmul.f32 1.0, %v1559
    %v1561 = vtanh.pop %v1463
    %v1562 = vtanh.pop %v1464
    %v1563 = vxor.u32 %v1483, 2147483648
    %v1564 = vxor.u32 %v1484, 2147483648
    %v1565 = vmul.f32 %v1563, 1.442695
    %v1566 = vpow.pop %v1565
    %v1567 = vmul.f32 %v1564, 1.442695
    %v1568 = vpow.pop %v1567
    %v1569 = vadd.f32 %v1566, 1.0
    %v1570 = vadd.f32 %v1568, 1.0
    %v1571 = vrcp.pop %v1569
    %v1572 = vmul.f32 %v1569, %v1571
    %v1573 = vsub.f32 1.0, %v1572
    %v1574 = vmul.f32 %v1571, %v1573
    %v1575 = vadd.f32 %v1571, %v1574
    %vm1576 = vweird.f32 %v1569
    %vm1577 = vweird.f32 %v1571
    %vm1578 = vmor %vm1576, %vm1577
    %v1579 = vsel %vm1578, %v1571, %v1575
    %v1580 = vand.u32 2147483647, %v1569
    %vm1581 = vcmp.eq.f32.partialorder %v1580, 8.507059e+37
    %v1582 = vand.u32 %v1569, 2147483648
    %v1583 = vor.u32 1.1754944e-38, %v1582
    %v1584 = vsel %vm1581, %v1583, %v1579
    %v1585 = vmul.f32 1.0, %v1584
    %v1586 = vrcp.pop %v1570
    %v1587 = vmul.f32 %v1570, %v1586
    %v1588 = vsub.f32 1.0, %v1587
    %v1589 = vmul.f32 %v1586, %v1588
    %v1590 = vadd.f32 %v1586, %v1589
    %vm1591 = vweird.f32 %v1570
    %vm1592 = vweird.f32 %v1586
    %vm1593 = vmor %vm1591, %vm1592
    %v1594 = vsel %vm1593, %v1586, %v1590
    %v1595 = vand.u32 2147483647, %v1570
    %vm1596 = vcmp.eq.f32.partialorder %v1595, 8.507059e+37
    %v1597 = vand.u32 %v1570, 2147483648
    %v1598 = vor.u32 1.1754944e-38, %v1597
    %v1599 = vsel %vm1596, %v1598, %v1594
    %v1600 = vmul.f32 1.0, %v1599
    %v1603 = vrot.slane %v1383, 7
    %v1604 = vrot.slane %v1384, 7
    %v1607 = vmul.f32 %v1545, %v1603
    %v1608 = vmul.f32 %v1560, %v1604
    %v1609 = vmul.f32 %v1507, %v1561
    %v1610 = vmul.f32 %v1522, %v1562
    %v1611 = vadd.f32 %v1607, %v1609
    %v1612 = vadd.f32 %v1608, %v1610
    %v1613 = vtanh.pop %v1611
    %v1614 = vtanh.pop %v1612
    %v1615 = vmul.f32 %v1585, %v1613
    %v1616 = vmul.f32 %v1600, %v1614
    %vm1617 = vcmask 521221
    %1618 = vst.msk [vmem:[#allocation2] sm:$0x20] %vm1617, %v1615
    %1619 = vst.msk [vmem:[#allocation2 + $0x8] sm:$0x20] %vm1617, %v1616
    %v1620 = vpack.c.bf16 %v1615, %v1615
    %v1621 = vpack.c.bf16 %v1616, %v1616
    %v1624 = vunpack.c.l.b16 %v1620
    %v1625 = vunpack.c.l.b16 %v1621
    %v1626 = vrot.slane %v1624, 5
    %v1627 = vrot.slane %v1625, 4
    %v1628 = vsel %vm492, %v1627, %v1626
    %v1629 = vpack.c.b16 %v1628, %v1628
    %v1631 = vsel %vm204, %v1629, 0
    %1633 = vmatpush.bf16.msra.mxu0 0
    %1634 = vmatpush.bf16.msra.mxu0 0
    %1635 = vmatpush.bf16.msra.mxu0 0
    %1636 = vmatpush.bf16.msra.mxu0 0
    %1637 = vmatpush.bf16.msra.mxu0 %v199
    %1638 = vmatpush.bf16.msra.mxu0 %v198
    %1639 = vmatpush.bf16.msra.mxu0 %v197
    %1640 = vmatpush.bf16.msra.mxu0 %v196
    %1641 = vmatmul.bf16.gmra.mxu0 %v1631
    %v1642 = vpop.f32.mrf.mxu0
    %v1643 = vadd.f32 0.0, %v1642
    %v1644 = vpop.f32.mrf.mxu0
    %1645 = vdwg.mxu0
    %v1647 = vrot.slane %v1643, 2
    %v1648 = vrot.slane %v1643, 3
    %v1651 = vadd.f32 %v69, %v1647
    %v1652 = vadd.f32 %v71, %v1648
    %1653 = vmatpush.bf16.msra.mxu0 0
    %1654 = vmatpush.bf16.msra.mxu0 0
    %1655 = vmatpush.bf16.msra.mxu0 0
    %1656 = vmatpush.bf16.msra.mxu0 0
    %1657 = vmatpush.bf16.msra.mxu0 %v246
    %1658 = vmatpush.bf16.msra.mxu0 %v245
    %1659 = vmatpush.bf16.msra.mxu0 %v244
    %1660 = vmatpush.bf16.msra.mxu0 %v243
    %1661 = vmatmul.bf16.gmra.mxu0 %v1631
    %v1662 = vpop.f32.mrf.mxu0
    %v1663 = vadd.f32 0.0, %v1662
    %v1664 = vpop.f32.mrf.mxu0
    %1665 = vdwg.mxu0
    %v1667 = vrot.slane %v1663, 2
    %v1668 = vrot.slane %v1663, 3
    %v1671 = vadd.f32 %v93, %v1667
    %v1672 = vadd.f32 %v95, %v1668
    %1673 = vmatpush.bf16.msra.mxu0 0
    %1674 = vmatpush.bf16.msra.mxu0 0
    %1675 = vmatpush.bf16.msra.mxu0 0
    %1676 = vmatpush.bf16.msra.mxu0 0
    %1677 = vmatpush.bf16.msra.mxu0 %v289
    %1678 = vmatpush.bf16.msra.mxu0 %v288
    %1679 = vmatpush.bf16.msra.mxu0 %v287
    %1680 = vmatpush.bf16.msra.mxu0 %v286
    %1681 = vmatmul.bf16.gmra.mxu0 %v1631
    %v1682 = vpop.f32.mrf.mxu0
    %v1683 = vadd.f32 0.0, %v1682
    %v1684 = vpop.f32.mrf.mxu0
    %1685 = vdwg.mxu0
    %v1687 = vrot.slane %v1683, 2
    %v1688 = vrot.slane %v1683, 3
    %v1691 = vadd.f32 %v117, %v1687
    %v1692 = vadd.f32 %v119, %v1688
    %1693 = vmatpush.bf16.msra.mxu0 0
    %1694 = vmatpush.bf16.msra.mxu0 0
    %1695 = vmatpush.bf16.msra.mxu0 0
    %1696 = vmatpush.bf16.msra.mxu0 0
    %1697 = vmatpush.bf16.msra.mxu0 %v332
    %1698 = vmatpush.bf16.msra.mxu0 %v331
    %1699 = vmatpush.bf16.msra.mxu0 %v330
    %1700 = vmatpush.bf16.msra.mxu0 %v329
    %1701 = vmatmul.bf16.gmra.mxu0 %v1631
    %v1702 = vpop.f32.mrf.mxu0
    %v1703 = vadd.f32 0.0, %v1702
    %v1704 = vpop.f32.mrf.mxu0
    %1705 = vdwg.mxu0
    %v1707 = vrot.slane %v1703, 2
    %v1708 = vrot.slane %v1703, 3
    %v1711 = vadd.f32 %v141, %v1707
    %v1712 = vadd.f32 %v143, %v1708
    %v1713 = vxor.u32 %v1651, 2147483648
    %v1714 = vxor.u32 %v1652, 2147483648
    %v1715 = vmul.f32 %v1713, 1.442695
    %v1716 = vpow.pop %v1715
    %v1717 = vmul.f32 %v1714, 1.442695
    %v1718 = vpow.pop %v1717
    %v1719 = vadd.f32 %v1716, 1.0
    %v1720 = vadd.f32 %v1718, 1.0
    %v1721 = vrcp.pop %v1719
    %v1722 = vmul.f32 %v1719, %v1721
    %v1723 = vsub.f32 1.0, %v1722
    %v1724 = vmul.f32 %v1721, %v1723
    %v1725 = vadd.f32 %v1721, %v1724
    %vm1726 = vweird.f32 %v1719
    %vm1727 = vweird.f32 %v1721
    %vm1728 = vmor %vm1726, %vm1727
    %v1729 = vsel %vm1728, %v1721, %v1725
    %v1730 = vand.u32 2147483647, %v1719
    %vm1731 = vcmp.eq.f32.partialorder %v1730, 8.507059e+37
    %v1732 = vand.u32 %v1719, 2147483648
    %v1733 = vor.u32 1.1754944e-38, %v1732
    %v1734 = vsel %vm1731, %v1733, %v1729
    %v1735 = vmul.f32 1.0, %v1734
    %v1736 = vrcp.pop %v1720
    %v1737 = vmul.f32 %v1720, %v1736
    %v1738 = vsub.f32 1.0, %v1737
    %v1739 = vmul.f32 %v1736, %v1738
    %v1740 = vadd.f32 %v1736, %v1739
    %vm1741 = vweird.f32 %v1720
    %vm1742 = vweird.f32 %v1736
    %vm1743 = vmor %vm1741, %vm1742
    %v1744 = vsel %vm1743, %v1736, %v1740
    %v1745 = vand.u32 2147483647, %v1720
    %vm1746 = vcmp.eq.f32.partialorder %v1745, 8.507059e+37
    %v1747 = vand.u32 %v1720, 2147483648
    %v1748 = vor.u32 1.1754944e-38, %v1747
    %v1749 = vsel %vm1746, %v1748, %v1744
    %v1750 = vmul.f32 1.0, %v1749
    %v1751 = vxor.u32 %v1671, 2147483648
    %v1752 = vxor.u32 %v1672, 2147483648
    %v1753 = vmul.f32 %v1751, 1.442695
    %v1754 = vpow.pop %v1753
    %v1755 = vmul.f32 %v1752, 1.442695
    %v1756 = vpow.pop %v1755
    %v1757 = vadd.f32 %v1754, 1.0
    %v1758 = vadd.f32 %v1756, 1.0
    %v1759 = vrcp.pop %v1757
    %v1760 = vmul.f32 %v1757, %v1759
    %v1761 = vsub.f32 1.0, %v1760
    %v1762 = vmul.f32 %v1759, %v1761
    %v1763 = vadd.f32 %v1759, %v1762
    %vm1764 = vweird.f32 %v1757
    %vm1765 = vweird.f32 %v1759
    %vm1766 = vmor %vm1764, %vm1765
    %v1767 = vsel %vm1766, %v1759, %v1763
    %v1768 = vand.u32 2147483647, %v1757
    %vm1769 = vcmp.eq.f32.partialorder %v1768, 8.507059e+37
    %v1770 = vand.u32 %v1757, 2147483648
    %v1771 = vor.u32 1.1754944e-38, %v1770
    %v1772 = vsel %vm1769, %v1771, %v1767
    %v1773 = vmul.f32 1.0, %v1772
    %v1774 = vrcp.pop %v1758
    %v1775 = vmul.f32 %v1758, %v1774
    %v1776 = vsub.f32 1.0, %v1775
    %v1777 = vmul.f32 %v1774, %v1776
    %v1778 = vadd.f32 %v1774, %v1777
    %vm1779 = vweird.f32 %v1758
    %vm1780 = vweird.f32 %v1774
    %vm1781 = vmor %vm1779, %vm1780
    %v1782 = vsel %vm1781, %v1774, %v1778
    %v1783 = vand.u32 2147483647, %v1758
    %vm1784 = vcmp.eq.f32.partialorder %v1783, 8.507059e+37
    %v1785 = vand.u32 %v1758, 2147483648
    %v1786 = vor.u32 1.1754944e-38, %v1785
    %v1787 = vsel %vm1784, %v1786, %v1782
    %v1788 = vmul.f32 1.0, %v1787
    %v1789 = vtanh.pop %v1691
    %v1790 = vtanh.pop %v1692
    %v1791 = vxor.u32 %v1711, 2147483648
    %v1792 = vxor.u32 %v1712, 2147483648
    %v1793 = vmul.f32 %v1791, 1.442695
    %v1794 = vpow.pop %v1793
    %v1795 = vmul.f32 %v1792, 1.442695
    %v1796 = vpow.pop %v1795
    %v1797 = vadd.f32 %v1794, 1.0
    %v1798 = vadd.f32 %v1796, 1.0
    %v1799 = vrcp.pop %v1797
    %v1800 = vmul.f32 %v1797, %v1799
    %v1801 = vsub.f32 1.0, %v1800
    %v1802 = vmul.f32 %v1799, %v1801
    %v1803 = vadd.f32 %v1799, %v1802
    %vm1804 = vweird.f32 %v1797
    %vm1805 = vweird.f32 %v1799
    %vm1806 = vmor %vm1804, %vm1805
    %v1807 = vsel %vm1806, %v1799, %v1803
    %v1808 = vand.u32 2147483647, %v1797
    %vm1809 = vcmp.eq.f32.partialorder %v1808, 8.507059e+37
    %v1810 = vand.u32 %v1797, 2147483648
    %v1811 = vor.u32 1.1754944e-38, %v1810
    %v1812 = vsel %vm1809, %v1811, %v1807
    %v1813 = vmul.f32 1.0, %v1812
    %v1814 = vrcp.pop %v1798
    %v1815 = vmul.f32 %v1798, %v1814
    %v1816 = vsub.f32 1.0, %v1815
    %v1817 = vmul.f32 %v1814, %v1816
    %v1818 = vadd.f32 %v1814, %v1817
    %vm1819 = vweird.f32 %v1798
    %vm1820 = vweird.f32 %v1814
    %vm1821 = vmor %vm1819, %vm1820
    %v1822 = vsel %vm1821, %v1814, %v1818
    %v1823 = vand.u32 2147483647, %v1798
    %vm1824 = vcmp.eq.f32.partialorder %v1823, 8.507059e+37
    %v1825 = vand.u32 %v1798, 2147483648
    %v1826 = vor.u32 1.1754944e-38, %v1825
    %v1827 = vsel %vm1824, %v1826, %v1822
    %v1828 = vmul.f32 1.0, %v1827
    %v1831 = vrot.slane %v1611, 7
    %v1832 = vrot.slane %v1612, 7
    %v1835 = vmul.f32 %v1773, %v1831
    %v1836 = vmul.f32 %v1788, %v1832
    %v1837 = vmul.f32 %v1735, %v1789
    %v1838 = vmul.f32 %v1750, %v1790
    %v1839 = vadd.f32 %v1835, %v1837
    %v1840 = vadd.f32 %v1836, %v1838
    %v1841 = vtanh.pop %v1839
    %v1842 = vtanh.pop %v1840
    %v1843 = vmul.f32 %v1813, %v1841
    %v1844 = vmul.f32 %v1828, %v1842
    %vm1845 = vcmask 522246
    %1846 = vst.msk [vmem:[#allocation2] sm:$0x40] %vm1845, %v1843
    %1847 = vst.msk [vmem:[#allocation2 + $0x8] sm:$0x40] %vm1845, %v1844
    %v1848 = vpack.c.bf16 %v1843, %v1843
    %v1849 = vpack.c.bf16 %v1844, %v1844
    %v1852 = vunpack.c.l.b16 %v1848
    %v1853 = vunpack.c.l.b16 %v1849
    %v1854 = vrot.slane %v1852, 6
    %v1855 = vrot.slane %v1853, 5
    %v1856 = vsel %vm492, %v1855, %v1854
    %v1857 = vpack.c.b16 %v1856, %v1856
    %v1859 = vsel %vm204, %v1857, 0
    %1861 = vmatpush.bf16.msra.mxu0 0
    %1862 = vmatpush.bf16.msra.mxu0 0
    %1863 = vmatpush.bf16.msra.mxu0 0
    %1864 = vmatpush.bf16.msra.mxu0 0
    %1865 = vmatpush.bf16.msra.mxu0 %v199
    %1866 = vmatpush.bf16.msra.mxu0 %v198
    %1867 = vmatpush.bf16.msra.mxu0 %v197
    %1868 = vmatpush.bf16.msra.mxu0 %v196
    %1869 = vmatmul.bf16.gmra.mxu0 %v1859
    %v1870 = vpop.f32.mrf.mxu0
    %v1871 = vadd.f32 0.0, %v1870
    %v1872 = vpop.f32.mrf.mxu0
    %1873 = vdwg.mxu0
    %v1875 = vrot.slane %v1871, 1
    %v1876 = vrot.slane %v1871, 2
    %v1879 = vadd.f32 %v69, %v1875
    %v1880 = vadd.f32 %v71, %v1876
    %1881 = vmatpush.bf16.msra.mxu0 0
    %1882 = vmatpush.bf16.msra.mxu0 0
    %1883 = vmatpush.bf16.msra.mxu0 0
    %1884 = vmatpush.bf16.msra.mxu0 0
    %1885 = vmatpush.bf16.msra.mxu0 %v246
    %1886 = vmatpush.bf16.msra.mxu0 %v245
    %1887 = vmatpush.bf16.msra.mxu0 %v244
    %1888 = vmatpush.bf16.msra.mxu0 %v243
    %1889 = vmatmul.bf16.gmra.mxu0 %v1859
    %v1890 = vpop.f32.mrf.mxu0
    %v1891 = vadd.f32 0.0, %v1890
    %v1892 = vpop.f32.mrf.mxu0
    %1893 = vdwg.mxu0
    %v1895 = vrot.slane %v1891, 1
    %v1896 = vrot.slane %v1891, 2
    %v1899 = vadd.f32 %v93, %v1895
    %v1900 = vadd.f32 %v95, %v1896
    %1901 = vmatpush.bf16.msra.mxu0 0
    %1902 = vmatpush.bf16.msra.mxu0 0
    %1903 = vmatpush.bf16.msra.mxu0 0
    %1904 = vmatpush.bf16.msra.mxu0 0
    %1905 = vmatpush.bf16.msra.mxu0 %v289
    %1906 = vmatpush.bf16.msra.mxu0 %v288
    %1907 = vmatpush.bf16.msra.mxu0 %v287
    %1908 = vmatpush.bf16.msra.mxu0 %v286
    %1909 = vmatmul.bf16.gmra.mxu0 %v1859
    %v1910 = vpop.f32.mrf.mxu0
    %v1911 = vadd.f32 0.0, %v1910
    %v1912 = vpop.f32.mrf.mxu0
    %1913 = vdwg.mxu0
    %v1915 = vrot.slane %v1911, 1
    %v1916 = vrot.slane %v1911, 2
    %v1919 = vadd.f32 %v117, %v1915
    %v1920 = vadd.f32 %v119, %v1916
    %1921 = vmatpush.bf16.msra.mxu0 0
    %1922 = vmatpush.bf16.msra.mxu0 0
    %1923 = vmatpush.bf16.msra.mxu0 0
    %1924 = vmatpush.bf16.msra.mxu0 0
    %1925 = vmatpush.bf16.msra.mxu0 %v332
    %1926 = vmatpush.bf16.msra.mxu0 %v331
    %1927 = vmatpush.bf16.msra.mxu0 %v330
    %1928 = vmatpush.bf16.msra.mxu0 %v329
    %1929 = vmatmul.bf16.gmra.mxu0 %v1859
    %v1930 = vpop.f32.mrf.mxu0
    %v1931 = vadd.f32 0.0, %v1930
    %v1932 = vpop.f32.mrf.mxu0
    %1933 = vdwg.mxu0
    %v1935 = vrot.slane %v1931, 1
    %v1936 = vrot.slane %v1931, 2
    %v1939 = vadd.f32 %v141, %v1935
    %v1940 = vadd.f32 %v143, %v1936
    %v1941 = vxor.u32 %v1879, 2147483648
    %v1942 = vxor.u32 %v1880, 2147483648
    %v1943 = vmul.f32 %v1941, 1.442695
    %v1944 = vpow.pop %v1943
    %v1945 = vmul.f32 %v1942, 1.442695
    %v1946 = vpow.pop %v1945
    %v1947 = vadd.f32 %v1944, 1.0
    %v1948 = vadd.f32 %v1946, 1.0
    %v1949 = vrcp.pop %v1947
    %v1950 = vmul.f32 %v1947, %v1949
    %v1951 = vsub.f32 1.0, %v1950
    %v1952 = vmul.f32 %v1949, %v1951
    %v1953 = vadd.f32 %v1949, %v1952
    %vm1954 = vweird.f32 %v1947
    %vm1955 = vweird.f32 %v1949
    %vm1956 = vmor %vm1954, %vm1955
    %v1957 = vsel %vm1956, %v1949, %v1953
    %v1958 = vand.u32 2147483647, %v1947
    %vm1959 = vcmp.eq.f32.partialorder %v1958, 8.507059e+37
    %v1960 = vand.u32 %v1947, 2147483648
    %v1961 = vor.u32 1.1754944e-38, %v1960
    %v1962 = vsel %vm1959, %v1961, %v1957
    %v1963 = vmul.f32 1.0, %v1962
    %v1964 = vrcp.pop %v1948
    %v1965 = vmul.f32 %v1948, %v1964
    %v1966 = vsub.f32 1.0, %v1965
    %v1967 = vmul.f32 %v1964, %v1966
    %v1968 = vadd.f32 %v1964, %v1967
    %vm1969 = vweird.f32 %v1948
    %vm1970 = vweird.f32 %v1964
    %vm1971 = vmor %vm1969, %vm1970
    %v1972 = vsel %vm1971, %v1964, %v1968
    %v1973 = vand.u32 2147483647, %v1948
    %vm1974 = vcmp.eq.f32.partialorder %v1973, 8.507059e+37
    %v1975 = vand.u32 %v1948, 2147483648
    %v1976 = vor.u32 1.1754944e-38, %v1975
    %v1977 = vsel %vm1974, %v1976, %v1972
    %v1978 = vmul.f32 1.0, %v1977
    %v1979 = vxor.u32 %v1899, 2147483648
    %v1980 = vxor.u32 %v1900, 2147483648
    %v1981 = vmul.f32 %v1979, 1.442695
    %v1982 = vpow.pop %v1981
    %v1983 = vmul.f32 %v1980, 1.442695
    %v1984 = vpow.pop %v1983
    %v1985 = vadd.f32 %v1982, 1.0
    %v1986 = vadd.f32 %v1984, 1.0
    %v1987 = vrcp.pop %v1985
    %v1988 = vmul.f32 %v1985, %v1987
    %v1989 = vsub.f32 1.0, %v1988
    %v1990 = vmul.f32 %v1987, %v1989
    %v1991 = vadd.f32 %v1987, %v1990
    %vm1992 = vweird.f32 %v1985
    %vm1993 = vweird.f32 %v1987
    %vm1994 = vmor %vm1992, %vm1993
    %v1995 = vsel %vm1994, %v1987, %v1991
    %v1996 = vand.u32 2147483647, %v1985
    %vm1997 = vcmp.eq.f32.partialorder %v1996, 8.507059e+37
    %v1998 = vand.u32 %v1985, 2147483648
    %v1999 = vor.u32 1.1754944e-38, %v1998
    %v2000 = vsel %vm1997, %v1999, %v1995
    %v2001 = vmul.f32 1.0, %v2000
    %v2002 = vrcp.pop %v1986
    %v2003 = vmul.f32 %v1986, %v2002
    %v2004 = vsub.f32 1.0, %v2003
    %v2005 = vmul.f32 %v2002, %v2004
    %v2006 = vadd.f32 %v2002, %v2005
    %vm2007 = vweird.f32 %v1986
    %vm2008 = vweird.f32 %v2002
    %vm2009 = vmor %vm2007, %vm2008
    %v2010 = vsel %vm2009, %v2002, %v2006
    %v2011 = vand.u32 2147483647, %v1986
    %vm2012 = vcmp.eq.f32.partialorder %v2011, 8.507059e+37
    %v2013 = vand.u32 %v1986, 2147483648
    %v2014 = vor.u32 1.1754944e-38, %v2013
    %v2015 = vsel %vm2012, %v2014, %v2010
    %v2016 = vmul.f32 1.0, %v2015
    %v2017 = vtanh.pop %v1919
    %v2018 = vtanh.pop %v1920
    %v2019 = vxor.u32 %v1939, 2147483648
    %v2020 = vxor.u32 %v1940, 2147483648
    %v2021 = vmul.f32 %v2019, 1.442695
    %v2022 = vpow.pop %v2021
    %v2023 = vmul.f32 %v2020, 1.442695
    %v2024 = vpow.pop %v2023
    %v2025 = vadd.f32 %v2022, 1.0
    %v2026 = vadd.f32 %v2024, 1.0
    %v2027 = vrcp.pop %v2025
    %v2028 = vmul.f32 %v2025, %v2027
    %v2029 = vsub.f32 1.0, %v2028
    %v2030 = vmul.f32 %v2027, %v2029
    %v2031 = vadd.f32 %v2027, %v2030
    %vm2032 = vweird.f32 %v2025
    %vm2033 = vweird.f32 %v2027
    %vm2034 = vmor %vm2032, %vm2033
    %v2035 = vsel %vm2034, %v2027, %v2031
    %v2036 = vand.u32 2147483647, %v2025
    %vm2037 = vcmp.eq.f32.partialorder %v2036, 8.507059e+37
    %v2038 = vand.u32 %v2025, 2147483648
    %v2039 = vor.u32 1.1754944e-38, %v2038
    %v2040 = vsel %vm2037, %v2039, %v2035
    %v2041 = vmul.f32 1.0, %v2040
    %v2042 = vrcp.pop %v2026
    %v2043 = vmul.f32 %v2026, %v2042
    %v2044 = vsub.f32 1.0, %v2043
    %v2045 = vmul.f32 %v2042, %v2044
    %v2046 = vadd.f32 %v2042, %v2045
    %vm2047 = vweird.f32 %v2026
    %vm2048 = vweird.f32 %v2042
    %vm2049 = vmor %vm2047, %vm2048
    %v2050 = vsel %vm2049, %v2042, %v2046
    %v2051 = vand.u32 2147483647, %v2026
    %vm2052 = vcmp.eq.f32.partialorder %v2051, 8.507059e+37
    %v2053 = vand.u32 %v2026, 2147483648
    %v2054 = vor.u32 1.1754944e-38, %v2053
    %v2055 = vsel %vm2052, %v2054, %v2050
    %v2056 = vmul.f32 1.0, %v2055
    %v2059 = vrot.slane %v1839, 7
    %v2060 = vrot.slane %v1840, 7
    %v2063 = vmul.f32 %v2001, %v2059
    %v2064 = vmul.f32 %v2016, %v2060
    %v2065 = vmul.f32 %v1963, %v2017
    %v2066 = vmul.f32 %v1978, %v2018
    %v2067 = vadd.f32 %v2063, %v2065
    %v2068 = vadd.f32 %v2064, %v2066
    %v2069 = vtanh.pop %v2067
    %v2070 = vtanh.pop %v2068
    %v2071 = vmul.f32 %v2041, %v2069
    %v2072 = vmul.f32 %v2056, %v2070
    %vm2073 = vcmask 523271
    %2074 = vst.msk [vmem:[#allocation2] sm:$0x80] %vm2073, %v2071
    %2075 = vst.msk [vmem:[#allocation2 + $0x8] sm:$0x80] %vm2073, %v2072
    %v2076 = vld [vmem:[#allocation2] sm:$0xff]
    %v2077 = vld [vmem:[#allocation2 + $0x8] sm:$0xff]
    %v2078 = vpack.c.bf16 %v2077, %v2076
    %v2079 = vld [vmem:[%s4] sm:$0xf]
    %v2080 = vld [vmem:[%s4 + $0x4] sm:$0xf]
    %v2081 = vld [vmem:[%s4 + $0x8] sm:$0xf]
    %v2082 = vld [vmem:[%s4 + $0xc] sm:$0xf]
    %v2083 = vld [vmem:[%s4 + $0x10] sm:$0xf]
    %v2084 = vld [vmem:[%s4 + $0x14] sm:$0xf]
    %v2085 = vld [vmem:[%s4 + $0x18] sm:$0xf]
    %v2086 = vld [vmem:[%s4 + $0x1c] sm:$0xf]
    %v2087 = vld [vmem:[%s5] sm:$0x1]
    %v2089 = vperm.slane %v2087, 0
    %v2099 = vunpack.c.l.b16 %v2079
    %v2100 = vunpack.c.l.b16 %v2080
    %v2101 = vunpack.c.l.b16 %v2081
    %v2102 = vunpack.c.l.b16 %v2082
    %v2103 = vunpack.c.l.b16 %v2083
    %v2104 = vunpack.c.l.b16 %v2084
    %v2105 = vunpack.c.l.b16 %v2085
    %v2106 = vunpack.c.l.b16 %v2086
    %v2107 = vpack.c.b16 %v2100, %v2099
    %v2108 = vpack.c.b16 %v2102, %v2101
    %v2109 = vpack.c.b16 %v2104, %v2103
    %v2110 = vpack.c.b16 %v2106, %v2105
    %v2116 = vsel %vm204, %v2078, 0
    %2118 = vmatpush.bf16.msra.mxu0 0
    %2119 = vmatpush.bf16.msra.mxu0 0
    %2120 = vmatpush.bf16.msra.mxu0 0
    %2121 = vmatpush.bf16.msra.mxu0 0
    %2122 = vmatpush.bf16.msra.mxu0 %v2110
    %2123 = vmatpush.bf16.msra.mxu0 %v2109
    %2124 = vmatpush.bf16.msra.mxu0 %v2108
    %2125 = vmatpush.bf16.msra.mxu0 %v2107
    %2126 = vmatmul.bf16.gmra.mxu0 %v2116
    %v2127 = vpop.f32.mrf.mxu0
    %v2128 = vadd.f32 %v2089, %v2127
    %v2129 = vpop.f32.mrf.mxu0
    %v2130 = vadd.f32 %v2089, %v2129
    %2131 = vdwg.mxu0
    %vm2132 = vcmask 15360
    %2133 = vst.msk [vmem:[%s6] sm:$0xff] %vm2132, %v2128
    %2134 = vst.msk [vmem:[%s6 + $0x8] sm:$0xff] %vm2132, %v2130
    // Predicated region
    $region30: #{modular_lstm_forward.1} parent=1 // pred_check
      _
    $region31: #{modular_lstm_forward.1} parent=1 // pred_check_branch
      %2136 = sbr.rel (0) target = $region33
    $region32: #{modular_lstm_forward.1} parent=1 // pred_region
      _
    $region33: #{modular_lstm_forward.1} parent=1 // pred_fallthru
      _
    // Predicated region
    $region34: #{modular_lstm_forward.1} parent=1 // pred_check
      _
    $region35: #{modular_lstm_forward.1} parent=1 // pred_check_branch
      %2138 = sbr.rel (0) target = $region37
    $region36: #{modular_lstm_forward.1} parent=1 // pred_region
      _
    $region37: #{modular_lstm_forward.1} parent=1 // pred_fallthru
      _
    %2139 = vsyncpa [#allocation4], 1

</llo_original>
